<compile_context>
chip_gen: v7x
topology: tpu7x:2x2x1
jax: 0.10.0
libtpu: 0.0.40
codegen_flags: <defaults>
</compile_context>

<pallas_src>
import functools

import jax
import jax.numpy as jnp
from jax import lax
from jax.experimental import pallas as pl
from jax.experimental.pallas import tpu as pltpu


def _shift_rows(v, dr):
    """out[r] = v[r - dr], zero-filled at the boundary (dr is a static row shift)."""
    n = v.shape[0]
    zeros = jnp.zeros((abs(dr),) + v.shape[1:], v.dtype)
    if dr > 0:
        return jnp.concatenate([zeros, v[: n - dr]], axis=0)
    return jnp.concatenate([v[-dr:], zeros], axis=0)


def _resblock_kernel(x_ref, w1_ref, b1_ref, w2_ref, b2_ref, out_ref,
                     *, width, res_scale, fold_kh):
    """One batch image per grid step, activations as 2-D (H*W, C) row slabs.

    x_ref   : (1, H*W, C)          input rows (also the residual), f32 or bf16
    w1_ref  : (3C, 3C) or (3,C,3C) bf16 conv1 weights (kh folded into K when fold_kh)
    b1_ref  : (1, C)               f32
    w2_ref  : same packing as w1   bf16 conv2 weights
    b2_ref  : (1, C)               f32
    out_ref : (1, H*W, C)          same dtype as x
    """
    _, R, C = out_ref.shape
    W = width

    x2 = x_ref[0]                                   # (R, C)
    x_f32 = x2.astype(jnp.float32)                  # residual path stays f32
    x_bf = x2.astype(jnp.bfloat16)                  # MXU operand, cast exactly once

    # Column index j = r % W of every row; masks the horizontal (kw) taps at the
    # left/right image borders.  Computed once, reused by both convs.
    j_idx = lax.broadcasted_iota(jnp.int32, (R, 1), 0) % W
    not_left = j_idx >= 1                           # a j-1 neighbour exists
    not_right = j_idx <= W - 2                      # a j+1 neighbour exists

    b1 = b1_ref[...]                                # (1, C) f32, broadcasts over rows
    b2 = b2_ref[...]

    def conv3x3(a_bf, w_ref):
        # Vertical (kh) taps: whole-row shifts by +-W rows (zero rows at the top /
        # bottom image border).  W is a multiple of the sublane tile, so these
        # concats are tile-aligned.
        up = _shift_rows(a_bf, W)                   # x[i-1, j]   (kh = 0)
        dn = _shift_rows(a_bf, -W)                  # x[i+1, j]   (kh = 2)
        if fold_kh:
            # kh folded into the contraction axis: ONE bf16 matmul with K = 3C.
            lhs = jnp.concatenate([up, a_bf, dn], axis=-1)            # (R, 3C)
            r = jnp.dot(lhs, w_ref[...], preferred_element_type=jnp.float32)
        else:
            # Wide channels already fill the MXU contraction depth: 3 matmuls, K = C.
            r = jnp.dot(up, w_ref[0], preferred_element_type=jnp.float32)
            r = r + jnp.dot(a_bf, w_ref[1], preferred_element_type=jnp.float32)
            r = r + jnp.dot(dn, w_ref[2], preferred_element_type=jnp.float32)
        # Horizontal (kw) taps live in the folded N axis of r: kw=0 / kw=2 groups are
        # shifted by one row (one image column) and masked at the image border.
        left = jnp.where(not_left, _shift_rows(r[:, 0:C], 1), 0.0)
        right = jnp.where(not_right, _shift_rows(r[:, 2 * C:3 * C], -1), 0.0)
        return left + r[:, C:2 * C] + right         # (R, C) f32

    y1 = jnp.maximum(conv3x3(x_bf, w1_ref) + b1, 0.0)          # conv1 + bias + ReLU
    y2 = conv3x3(y1.astype(jnp.bfloat16), w2_ref) + b2          # conv2 + bias

    if res_scale != 1.0:                                        # static fold at trace
        y2 = y2 * res_scale
    out_ref[...] = (y2 + x_f32)[None].astype(out_ref.dtype)


def _pack_weight(w_hwio, fold_kh):
    """HWIO (KH, KW, Cin, Cout) -> bf16 MXU weight.

    fold_kh : (KH*Cin, KW*Cout)  with  Wp[kh*Cin+ci, kw*Cout+co] = w[kh, kw, ci, co]
    else    : (KH, Cin, KW*Cout) with  Wp[kh, ci, kw*Cout+co]    = w[kh, kw, ci, co]
    """
    kh, kw, cin, cout = w_hwio.shape
    t = jnp.transpose(w_hwio, (0, 2, 1, 3))          # (KH, Cin, KW, Cout)
    shape = (kh * cin, kw * cout) if fold_kh else (kh, cin, kw * cout)
    return t.reshape(shape).astype(jnp.bfloat16)


def res_block_nhwc(x_nhwc, params, res_scale=1.0):
    """Fused ResBlock forward with NHWC activations (input dtype is preserved).

    Preferred network-level entry point: keep activations NHWC across SSPSR so there
    are no per-block layout transposes; the NCHW wrapper below only exists to match
    the PyTorch API at the model boundary."""
    w1, b1, w2, b2 = params                          # HWIO weights, (C,) biases
    KH, KW, Cin, Cout = w1.shape
    assert (KH, KW) == (3, 3) and Cin == Cout, "kernel assumes 3x3 same-channel convs"
    N, H, W, C = x_nhwc.shape
    assert C == Cin
    R = H * W

    # Fold kh into the MXU contraction axis only while C under-fills the MXU
    # (K = 3C); at realistic SSPSR n_feats (>= 128) K = C already fills the array.
    fold_kh = C < 128

    w1p = _pack_weight(w1, fold_kh)
    w2p = _pack_weight(w2, fold_kh)
    b1r = b1.reshape(1, C).astype(jnp.float32)
    b2r = b2.reshape(1, C).astype(jnp.float32)

    if fold_kh:
        w_spec = pl.BlockSpec((KH * C, KW * C), lambda b: (0, 0),
                              pipeline_mode=pl.Buffered(1))
    else:
        w_spec = pl.BlockSpec((KH, C, KW * C), lambda b: (0, 0, 0),
                              pipeline_mode=pl.Buffered(1))
    b_spec = pl.BlockSpec((1, C), lambda b: (0, 0), pipeline_mode=pl.Buffered(1))

    kernel = functools.partial(_resblock_kernel, width=W,
                               res_scale=float(res_scale), fold_kh=fold_kh)

    out = pl.pallas_call(
        kernel,
        out_shape=jax.ShapeDtypeStruct((N, R, C), x_nhwc.dtype),
        grid_spec=pltpu.PrefetchScalarGridSpec(
            num_scalar_prefetch=0,
            grid=(N,),
            in_specs=[
                pl.BlockSpec((1, R, C), lambda b: (b, 0, 0)),     # x rows (1 read)
                w_spec, b_spec,                                    # conv1 params
                w_spec, b_spec,                                    # conv2 params
            ],
            out_specs=pl.BlockSpec((1, R, C), lambda b: (b, 0, 0)),
        ),
        compiler_params=pltpu.CompilerParams(
            dimension_semantics=("parallel",),
            vmem_limit_bytes=32 * 1024 * 1024,
        ),
    )(x_nhwc.reshape(N, R, C), w1p, b1r, w2p, b2r)
    return out.reshape(N, H, W, C)


def res_block(x_nchw, params, res_scale=1.0):
    """PyTorch-layout wrapper (NCHW in/out).  Layout transposes live only at this
    model boundary; inside a full network call res_block_nhwc directly."""
    x = jnp.transpose(x_nchw, (0, 2, 3, 1))
    out = res_block_nhwc(x, params, res_scale)
    return jnp.transpose(out, (0, 3, 1, 2))


def init_params(key, n_feats, kernel_size=3):
    """Deterministic synthetic parameters.  Conv weights stored HWIO
    (a PyTorch OIHW weight would be converted with w.transpose(2, 3, 1, 0))."""
    ks = jax.random.split(key, 4)
    sc = 0.1
    w1 = sc * jax.random.normal(ks[0], (kernel_size, kernel_size, n_feats, n_feats),
                                jnp.float32)
    b1 = sc * jax.random.normal(ks[1], (n_feats,), jnp.float32)
    w2 = sc * jax.random.normal(ks[2], (kernel_size, kernel_size, n_feats, n_feats),
                                jnp.float32)
    b2 = sc * jax.random.normal(ks[3], (n_feats,), jnp.float32)
    return (w1, b1, w2, b2)


def reference(x_nchw, params, res_scale=1.0):
    """Pure-JAX f32 reference reproducing the PyTorch ResBlock forward (NCHW API)."""
    w1, b1, w2, b2 = params
    x = jnp.transpose(x_nchw, (0, 2, 3, 1)).astype(jnp.float32)
    dn = jax.lax.conv_dimension_numbers(x.shape, w1.shape, ('NHWC', 'HWIO', 'NHWC'))
    hp = jax.lax.Precision.HIGHEST
    y1 = jax.lax.conv_general_dilated(x, w1, (1, 1), 'SAME', dimension_numbers=dn,
                                      precision=hp) + b1[None, None, None, :]
    y1 = jnp.maximum(y1, 0.0)
    y2 = jax.lax.conv_general_dilated(y1, w2, (1, 1), 'SAME', dimension_numbers=dn,
                                      precision=hp) + b2[None, None, None, :]
    out = y2 * res_scale + x
    return jnp.transpose(out, (0, 3, 1, 2))


if __name__ == "__main__":
    key = jax.random.PRNGKey(0)
    kx, kp = jax.random.split(key)

    N, C, H, W = 2, 32, 16, 16
    x = jax.random.normal(kx, (N, C, H, W), jnp.float32)
    params = init_params(kp, n_feats=C, kernel_size=3)

    for rs in (1.0, 0.1):
        out = jax.block_until_ready(res_block(x, params, res_scale=rs))
        ref = jax.block_until_ready(reference(x, params, res_scale=rs))

        assert out.shape == (N, C, H, W)
        assert out.dtype == x.dtype
        # bf16 MXU operands through two 288-term 3x3 convs: worst-case elementwise
        # deviation from the f32 reference is a few 1e-2 while the aggregate relative
        # error stays well below 1%.
        max_abs = jnp.max(jnp.abs(out - ref))
        assert jnp.allclose(out, ref, rtol=3e-2, atol=3e-2), (
            f"res_scale={rs}: max abs diff {max_abs}")
        rel_l2 = jnp.linalg.norm(out - ref) / jnp.linalg.norm(ref)
        assert rel_l2 < 1e-2, f"res_scale={rs}: relative L2 error {rel_l2}"

    print("KERNEL_OK")
</pallas_src>

<mosaic_0001>
module attributes {stable_mosaic.version = 11 : i64} {
  func.func @_resblock_kernel(%arg0: i32, %arg1: memref<1x256x32xf32, #tpu.memory_space<vmem>>, %arg2: memref<96x96xbf16, #tpu.memory_space<vmem>>, %arg3: memref<1x32xf32, #tpu.memory_space<vmem>>, %arg4: memref<96x96xbf16, #tpu.memory_space<vmem>>, %arg5: memref<1x32xf32, #tpu.memory_space<vmem>>, %arg6: memref<1x256x32xf32, #tpu.memory_space<vmem>>) attributes {dimension_semantics = [#tpu.dimension_semantics<parallel>], iteration_bounds = array<i64: 2>, scalar_prefetch = 0 : i64, scratch_operands = 0 : i64, tpu.core_type = #tpu.core_type<tc>, window_params = [{transform_indices = @transform_0, window_bounds = array<i64: 1, 256, 32>}, {pipeline_mode = #tpu.pipeline_mode<synchronous>, transform_indices = @transform_1, window_bounds = array<i64: 96, 96>}, {pipeline_mode = #tpu.pipeline_mode<synchronous>, transform_indices = @transform_2, window_bounds = array<i64: 1, 32>}, {pipeline_mode = #tpu.pipeline_mode<synchronous>, transform_indices = @transform_3, window_bounds = array<i64: 96, 96>}, {pipeline_mode = #tpu.pipeline_mode<synchronous>, transform_indices = @transform_4, window_bounds = array<i64: 1, 32>}, {transform_indices = @transform_5, window_bounds = array<i64: 1, 256, 32>}]} {
    %c0 = arith.constant 0 : index
    %c0_0 = arith.constant 0 : index
    %c0_1 = arith.constant 0 : index
    %0 = vector.load %arg1[%c0, %c0_0, %c0_1] : memref<1x256x32xf32, #tpu.memory_space<vmem>>, vector<1x256x32xf32>
    %1 = vector.shape_cast %0 : vector<1x256x32xf32> to vector<256x32xf32>
    %2 = arith.truncf %1 : vector<256x32xf32> to vector<256x32xbf16>
    %3 = tpu.iota {dimensions = array<i32: 0>} : vector<256x1xi32>
    %c16_i32 = arith.constant 16 : i32
    %c0_i32 = arith.constant 0 : i32
    %4 = arith.cmpi eq, %c16_i32, %c0_i32 : i32
    %c1_i32 = arith.constant 1 : i32
    %5 = arith.select %4, %c1_i32, %c16_i32 : i32
    %6 = vector.broadcast %5 : i32 to vector<256x1xi32>
    %7 = arith.remsi %3, %6 : vector<256x1xi32>
    %c0_i32_2 = arith.constant 0 : i32
    %8 = vector.broadcast %c0_i32_2 : i32 to vector<256x1xi32>
    %9 = arith.cmpi ne, %7, %8 : vector<256x1xi32>
    %c0_i32_3 = arith.constant 0 : i32
    %10 = vector.broadcast %c0_i32_3 : i32 to vector<256x1xi32>
    %11 = arith.cmpi slt, %7, %10 : vector<256x1xi32>
    %c0_i32_4 = arith.constant 0 : i32
    %12 = arith.cmpi slt, %5, %c0_i32_4 : i32
    %13 = vector.broadcast %12 : i1 to vector<256x1xi1>
    %14 = vector.broadcast %13 : vector<256x1xi1> to vector<256x1xi1>
    %15 = arith.xori %11, %14 : vector<256x1xi1>
    %16 = arith.andi %15, %9 : vector<256x1xi1>
    %17 = vector.broadcast %5 : i32 to vector<256x1xi32>
    %18 = arith.addi %7, %17 : vector<256x1xi32>
    %19 = arith.select %16, %18, %7 : vector<256x1xi1>, vector<256x1xi32>
    %c1_i32_5 = arith.constant 1 : i32
    %20 = vector.broadcast %c1_i32_5 : i32 to vector<256x1xi32>
    %21 = arith.cmpi sge, %19, %20 : vector<256x1xi32>
    %c14_i32 = arith.constant 14 : i32
    %22 = vector.broadcast %c14_i32 : i32 to vector<256x1xi32>
    %23 = arith.cmpi sle, %19, %22 : vector<256x1xi32>
    %c0_6 = arith.constant 0 : index
    %c0_7 = arith.constant 0 : index
    %24 = vector.load %arg3[%c0_6, %c0_7] : memref<1x32xf32, #tpu.memory_space<vmem>>, vector<1x32xf32>
    %c0_8 = arith.constant 0 : index
    %c0_9 = arith.constant 0 : index
    %25 = vector.load %arg5[%c0_8, %c0_9] : memref<1x32xf32, #tpu.memory_space<vmem>>, vector<1x32xf32>
    %cst = arith.constant 0.000000e+00 : bf16
    %26 = vector.broadcast %cst : bf16 to vector<16x32xbf16>
    %27 = vector.extract_strided_slice %2 {offsets = [0, 0], sizes = [240, 32], strides = [1, 1]} : vector<256x32xbf16> to vector<240x32xbf16>
    %28 = tpu.concatenate %26, %27 in 0 : vector<16x32xbf16>, vector<240x32xbf16> -> vector<256x32xbf16>
    %cst_10 = arith.constant 0.000000e+00 : bf16
    %29 = vector.broadcast %cst_10 : bf16 to vector<16x32xbf16>
    %30 = vector.extract_strided_slice %2 {offsets = [16, 0], sizes = [240, 32], strides = [1, 1]} : vector<256x32xbf16> to vector<240x32xbf16>
    %31 = tpu.concatenate %30, %29 in 0 : vector<240x32xbf16>, vector<16x32xbf16> -> vector<256x32xbf16>
    %32 = tpu.concatenate %28, %2, %31 in 1 : vector<256x32xbf16>, vector<256x32xbf16>, vector<256x32xbf16> -> vector<256x96xbf16>
    %c0_11 = arith.constant 0 : index
    %c0_12 = arith.constant 0 : index
    %33 = vector.load %arg2[%c0_11, %c0_12] : memref<96x96xbf16, #tpu.memory_space<vmem>>, vector<96x96xbf16>
    %cst_13 = arith.constant dense<0.000000e+00> : vector<256x96xf32>
    %34 = tpu.matmul %32, %33, %cst_13 {dimension_numbers = #tpu.dot_dimension_numbers<[1], [0], [0], [1], [0, 0, 1, 1], [], []>} : vector<256x96xbf16>, vector<96x96xbf16>, vector<256x96xf32> -> vector<256x96xf32>
    %35 = vector.extract_strided_slice %34 {offsets = [0, 0], sizes = [256, 32], strides = [1, 1]} : vector<256x96xf32> to vector<256x32xf32>
    %cst_14 = arith.constant 0.000000e+00 : f32
    %36 = vector.broadcast %cst_14 : f32 to vector<1x32xf32>
    %37 = vector.extract_strided_slice %35 {offsets = [0, 0], sizes = [255, 32], strides = [1, 1]} : vector<256x32xf32> to vector<255x32xf32>
    %38 = tpu.concatenate %36, %37 in 0 : vector<1x32xf32>, vector<255x32xf32> -> vector<256x32xf32>
    %cst_15 = arith.constant 0.000000e+00 : f32
    %39 = vector.shape_cast %21 : vector<256x1xi1> to vector<256x1xi1>
    %40 = vector.broadcast %39 : vector<256x1xi1> to vector<256x32xi1>
    %41 = vector.broadcast %cst_15 : f32 to vector<256x32xf32>
    %42 = arith.select %40, %38, %41 : vector<256x32xi1>, vector<256x32xf32>
    %43 = vector.extract_strided_slice %34 {offsets = [0, 64], sizes = [256, 32], strides = [1, 1]} : vector<256x96xf32> to vector<256x32xf32>
    %cst_16 = arith.constant 0.000000e+00 : f32
    %44 = vector.broadcast %cst_16 : f32 to vector<1x32xf32>
    %45 = vector.extract_strided_slice %43 {offsets = [1, 0], sizes = [255, 32], strides = [1, 1]} : vector<256x32xf32> to vector<255x32xf32>
    %46 = tpu.concatenate %45, %44 in 0 : vector<255x32xf32>, vector<1x32xf32> -> vector<256x32xf32>
    %cst_17 = arith.constant 0.000000e+00 : f32
    %47 = vector.shape_cast %23 : vector<256x1xi1> to vector<256x1xi1>
    %48 = vector.broadcast %47 : vector<256x1xi1> to vector<256x32xi1>
    %49 = vector.broadcast %cst_17 : f32 to vector<256x32xf32>
    %50 = arith.select %48, %46, %49 : vector<256x32xi1>, vector<256x32xf32>
    %51 = vector.extract_strided_slice %34 {offsets = [0, 32], sizes = [256, 32], strides = [1, 1]} : vector<256x96xf32> to vector<256x32xf32>
    %52 = arith.addf %42, %51 : vector<256x32xf32>
    %53 = arith.addf %52, %50 : vector<256x32xf32>
    %54 = vector.broadcast %24 : vector<1x32xf32> to vector<256x32xf32>
    %55 = arith.addf %53, %54 : vector<256x32xf32>
    %cst_18 = arith.constant 0.000000e+00 : f32
    %56 = vector.broadcast %cst_18 : f32 to vector<256x32xf32>
    %57 = arith.maximumf %55, %56 : vector<256x32xf32>
    %58 = arith.truncf %57 : vector<256x32xf32> to vector<256x32xbf16>
    %cst_19 = arith.constant 0.000000e+00 : bf16
    %59 = vector.broadcast %cst_19 : bf16 to vector<16x32xbf16>
    %60 = vector.extract_strided_slice %58 {offsets = [0, 0], sizes = [240, 32], strides = [1, 1]} : vector<256x32xbf16> to vector<240x32xbf16>
    %61 = tpu.concatenate %59, %60 in 0 : vector<16x32xbf16>, vector<240x32xbf16> -> vector<256x32xbf16>
    %cst_20 = arith.constant 0.000000e+00 : bf16
    %62 = vector.broadcast %cst_20 : bf16 to vector<16x32xbf16>
    %63 = vector.extract_strided_slice %58 {offsets = [16, 0], sizes = [240, 32], strides = [1, 1]} : vector<256x32xbf16> to vector<240x32xbf16>
    %64 = tpu.concatenate %63, %62 in 0 : vector<240x32xbf16>, vector<16x32xbf16> -> vector<256x32xbf16>
    %65 = tpu.concatenate %61, %58, %64 in 1 : vector<256x32xbf16>, vector<256x32xbf16>, vector<256x32xbf16> -> vector<256x96xbf16>
    %c0_21 = arith.constant 0 : index
    %c0_22 = arith.constant 0 : index
    %66 = vector.load %arg4[%c0_21, %c0_22] : memref<96x96xbf16, #tpu.memory_space<vmem>>, vector<96x96xbf16>
    %cst_23 = arith.constant dense<0.000000e+00> : vector<256x96xf32>
    %67 = tpu.matmul %65, %66, %cst_23 {dimension_numbers = #tpu.dot_dimension_numbers<[1], [0], [0], [1], [0, 0, 1, 1], [], []>} : vector<256x96xbf16>, vector<96x96xbf16>, vector<256x96xf32> -> vector<256x96xf32>
    %68 = vector.extract_strided_slice %67 {offsets = [0, 0], sizes = [256, 32], strides = [1, 1]} : vector<256x96xf32> to vector<256x32xf32>
    %cst_24 = arith.constant 0.000000e+00 : f32
    %69 = vector.broadcast %cst_24 : f32 to vector<1x32xf32>
    %70 = vector.extract_strided_slice %68 {offsets = [0, 0], sizes = [255, 32], strides = [1, 1]} : vector<256x32xf32> to vector<255x32xf32>
    %71 = tpu.concatenate %69, %70 in 0 : vector<1x32xf32>, vector<255x32xf32> -> vector<256x32xf32>
    %cst_25 = arith.constant 0.000000e+00 : f32
    %72 = vector.shape_cast %21 : vector<256x1xi1> to vector<256x1xi1>
    %73 = vector.broadcast %72 : vector<256x1xi1> to vector<256x32xi1>
    %74 = vector.broadcast %cst_25 : f32 to vector<256x32xf32>
    %75 = arith.select %73, %71, %74 : vector<256x32xi1>, vector<256x32xf32>
    %76 = vector.extract_strided_slice %67 {offsets = [0, 64], sizes = [256, 32], strides = [1, 1]} : vector<256x96xf32> to vector<256x32xf32>
    %cst_26 = arith.constant 0.000000e+00 : f32
    %77 = vector.broadcast %cst_26 : f32 to vector<1x32xf32>
    %78 = vector.extract_strided_slice %76 {offsets = [1, 0], sizes = [255, 32], strides = [1, 1]} : vector<256x32xf32> to vector<255x32xf32>
    %79 = tpu.concatenate %78, %77 in 0 : vector<255x32xf32>, vector<1x32xf32> -> vector<256x32xf32>
    %cst_27 = arith.constant 0.000000e+00 : f32
    %80 = vector.shape_cast %23 : vector<256x1xi1> to vector<256x1xi1>
    %81 = vector.broadcast %80 : vector<256x1xi1> to vector<256x32xi1>
    %82 = vector.broadcast %cst_27 : f32 to vector<256x32xf32>
    %83 = arith.select %81, %79, %82 : vector<256x32xi1>, vector<256x32xf32>
    %84 = vector.extract_strided_slice %67 {offsets = [0, 32], sizes = [256, 32], strides = [1, 1]} : vector<256x96xf32> to vector<256x32xf32>
    %85 = arith.addf %75, %84 : vector<256x32xf32>
    %86 = arith.addf %85, %83 : vector<256x32xf32>
    %87 = vector.broadcast %25 : vector<1x32xf32> to vector<256x32xf32>
    %88 = arith.addf %86, %87 : vector<256x32xf32>
    %89 = arith.addf %88, %1 : vector<256x32xf32>
    %90 = vector.shape_cast %89 : vector<256x32xf32> to vector<1x256x32xf32>
    %c0_28 = arith.constant 0 : index
    %c0_29 = arith.constant 0 : index
    %c0_30 = arith.constant 0 : index
    %91 = vector.load %arg6[%c0_28, %c0_29, %c0_30] : memref<1x256x32xf32, #tpu.memory_space<vmem>>, vector<1x256x32xf32>
    tpu.vector_store %arg6[%c0_28, %c0_29, %c0_30], %90 {strides = array<i32>} : memref<1x256x32xf32, #tpu.memory_space<vmem>>, vector<1x256x32xf32>,
    return
  }
  func.func @transform_0(%arg0: i32) -> (i32, i32, i32) {
    %c0_i32 = arith.constant 0 : i32
    %c0_i32_0 = arith.constant 0 : i32
    %c0_i32_1 = arith.constant 0 : i32
    return %arg0, %c0_i32, %c0_i32_0 : i32, i32, i32
  }
  func.func @transform_1(%arg0: i32) -> (i32, i32) {
    %c0_i32 = arith.constant 0 : i32
    %c0_i32_0 = arith.constant 0 : i32
    %c0_i32_1 = arith.constant 0 : i32
    return %c0_i32, %c0_i32_0 : i32, i32
  }
  func.func @transform_2(%arg0: i32) -> (i32, i32) {
    %c0_i32 = arith.constant 0 : i32
    %c0_i32_0 = arith.constant 0 : i32
    %c0_i32_1 = arith.constant 0 : i32
    return %c0_i32, %c0_i32_0 : i32, i32
  }
  func.func @transform_3(%arg0: i32) -> (i32, i32) {
    %c0_i32 = arith.constant 0 : i32
    %c0_i32_0 = arith.constant 0 : i32
    %c0_i32_1 = arith.constant 0 : i32
    return %c0_i32, %c0_i32_0 : i32, i32
  }
  func.func @transform_4(%arg0: i32) -> (i32, i32) {
    %c0_i32 = arith.constant 0 : i32
    %c0_i32_0 = arith.constant 0 : i32
    %c0_i32_1 = arith.constant 0 : i32
    return %c0_i32, %c0_i32_0 : i32, i32
  }
  func.func @transform_5(%arg0: i32) -> (i32, i32, i32) {
    %c0_i32 = arith.constant 0 : i32
    %c0_i32_0 = arith.constant 0 : i32
    %c0_i32_1 = arith.constant 0 : i32
    return %arg0, %c0_i32, %c0_i32_0 : i32, i32, i32
  }
}

</mosaic_0001>

<llo_original>
// kernel: tpu_custom_call.1
$region0: #{tpu_custom_call.1}
  #allocation0 [shape = 'u32[]', space=smem, size = 0x4, offset = 0x4, fixed_abs, tag = 'smem constant byte address 0x4 - core index']
  #allocation1 [shape = 'u32[144,128]{1,0:T(1,128)}', space=vmem, size = 0x12000, scoped, tag = 'internal scratch']
  %s0 = inlined_call_operand.vmem [shape: f32[2,256,32], index: 0, kind: input, shape index: {}]
  %s1 = inlined_call_operand.vmem [shape: bf16[96,96], index: 1, kind: input, shape index: {}]
  %s2 = inlined_call_operand.vmem [shape: f32[1,32], index: 2, kind: input, shape index: {}]
  %s3 = inlined_call_operand.vmem [shape: bf16[96,96], index: 3, kind: input, shape index: {}]
  %s4 = inlined_call_operand.vmem [shape: f32[1,32], index: 4, kind: input, shape index: {}]
  %s5 = inlined_call_operand.vmem [shape: f32[2,256,32], index: 5, kind: output, shape index: {}]
  %s6 = sld [smem:[#allocation0]]
  $region53: #{tpu_custom_call.1} parent=0
    _
  %s8 = ssub.s32 1, %s6
  %s9 = scalar_select 0, %s8, %s6
  loop: start=0, step=1, limit=4
  $region2: #{tpu_custom_call.1} parent=0 // loop_pre_header
    _
  $region3: #{tpu_custom_call.1} parent=0 // loop_header
    %s11 = sphi 0, %s15
    %p12 = scmp.ge.s32.totalorder %s11, 4
    %s21 = sphi 0, %s23
    %s24 = sphi 0, %s21
    %s25 = sphi 0, %s24
    %s41 = sphi 0, %s25
    %s45 = sphi 0, %s45
    %s47 = sphi 0, %s45
    %s48 = sphi 0, %s47
    %s62 = sphi 0, %s48
    %s66 = sphi 0, %s66
    %s68 = sphi 0, %s66
    %s69 = sphi 0, %s68
    %s83 = sphi 0, %s69
    %s87 = sphi 0, %s87
    %s89 = sphi 0, %s87
    %s90 = sphi 0, %s89
    %s104 = sphi 0, %s90
    %s108 = sphi 0, %s108
    %s110 = sphi 0, %s108
    %s111 = sphi 0, %s110
    %s125 = sphi 0, %s111
    %s131 = sphi 0, %s133
    %s134 = sphi 0, %s131
    %s135 = sphi 0, %s134
    %s151 = sphi 0, %s135
  $region4: #{tpu_custom_call.1} parent=0 // loop_header_branch
    %14 = sbr.rel (%p12) target = $region8
  $region5: #{tpu_custom_call.1} parent=0 // loop_body
    %s16 = ssub.s32 %s11, 1
    %s17 = ssub.s32 %s11, 2
    %s18 = sadd.s32 %s11, 1
    %s19 = ssub.s32 %s11, %s18
    %p20 = scmp.eq.s32.totalorder %s19, 0
    %s22 = sadd.s32 %s21, 1
    %s23 = scalar_select %p20, %s21, %s22
    %p26 = pneg %p20
    %p27 = scmp.eq.s32.totalorder %s11, 1
    %p28 = por %p26, %p27
    %p29 = scmp.ne.s32.totalorder %s21, %s24
    %p30 = scmp.eq.s32.totalorder %s11, 0
    %p31 = por %p29, %p30
    %p32 = scmp.ne.s32.totalorder %s21, %s24
    %p33 = scmp.eq.s32.totalorder %s16, 1
    %p34 = por %p32, %p33
    %p35 = scmp.ne.s32.totalorder %s24, %s25
    %p36 = scmp.eq.s32.totalorder %s16, 0
    %p37 = por %p35, %p36
    %p38 = scmp.ne.s32.totalorder %s24, %s25
    %p39 = scmp.eq.s32.totalorder %s17, 1
    %p40 = por %p38, %p39
    %p42 = scmp.ne.s32.totalorder %s25, %s41
    %p43 = scmp.eq.s32.totalorder %s17, 0
    %p44 = por %p42, %p43
    %s46 = sadd.s32 %s45, 1
    %p49 = scmp.eq.s32.totalorder %s11, 1
    %p50 = scmp.ne.s32.totalorder %s45, %s47
    %p51 = scmp.eq.s32.totalorder %s11, 0
    %p52 = por %p50, %p51
    %p53 = scmp.ne.s32.totalorder %s45, %s47
    %p54 = scmp.eq.s32.totalorder %s16, 1
    %p55 = por %p53, %p54
    %p56 = scmp.ne.s32.totalorder %s47, %s48
    %p57 = scmp.eq.s32.totalorder %s16, 0
    %p58 = por %p56, %p57
    %p59 = scmp.ne.s32.totalorder %s47, %s48
    %p60 = scmp.eq.s32.totalorder %s17, 1
    %p61 = por %p59, %p60
    %p63 = scmp.ne.s32.totalorder %s48, %s62
    %p64 = scmp.eq.s32.totalorder %s17, 0
    %p65 = por %p63, %p64
    %s67 = sadd.s32 %s66, 1
    %p70 = scmp.eq.s32.totalorder %s11, 1
    %p71 = scmp.ne.s32.totalorder %s66, %s68
    %p72 = scmp.eq.s32.totalorder %s11, 0
    %p73 = por %p71, %p72
    %p74 = scmp.ne.s32.totalorder %s66, %s68
    %p75 = scmp.eq.s32.totalorder %s16, 1
    %p76 = por %p74, %p75
    %p77 = scmp.ne.s32.totalorder %s68, %s69
    %p78 = scmp.eq.s32.totalorder %s16, 0
    %p79 = por %p77, %p78
    %p80 = scmp.ne.s32.totalorder %s68, %s69
    %p81 = scmp.eq.s32.totalorder %s17, 1
    %p82 = por %p80, %p81
    %p84 = scmp.ne.s32.totalorder %s69, %s83
    %p85 = scmp.eq.s32.totalorder %s17, 0
    %p86 = por %p84, %p85
    %s88 = sadd.s32 %s87, 1
    %p91 = scmp.eq.s32.totalorder %s11, 1
    %p92 = scmp.ne.s32.totalorder %s87, %s89
    %p93 = scmp.eq.s32.totalorder %s11, 0
    %p94 = por %p92, %p93
    %p95 = scmp.ne.s32.totalorder %s87, %s89
    %p96 = scmp.eq.s32.totalorder %s16, 1
    %p97 = por %p95, %p96
    %p98 = scmp.ne.s32.totalorder %s89, %s90
    %p99 = scmp.eq.s32.totalorder %s16, 0
    %p100 = por %p98, %p99
    %p101 = scmp.ne.s32.totalorder %s89, %s90
    %p102 = scmp.eq.s32.totalorder %s17, 1
    %p103 = por %p101, %p102
    %p105 = scmp.ne.s32.totalorder %s90, %s104
    %p106 = scmp.eq.s32.totalorder %s17, 0
    %p107 = por %p105, %p106
    %s109 = sadd.s32 %s108, 1
    %p112 = scmp.eq.s32.totalorder %s11, 1
    %p113 = scmp.ne.s32.totalorder %s108, %s110
    %p114 = scmp.eq.s32.totalorder %s11, 0
    %p115 = por %p113, %p114
    %p116 = scmp.ne.s32.totalorder %s108, %s110
    %p117 = scmp.eq.s32.totalorder %s16, 1
    %p118 = por %p116, %p117
    %p119 = scmp.ne.s32.totalorder %s110, %s111
    %p120 = scmp.eq.s32.totalorder %s16, 0
    %p121 = por %p119, %p120
    %p122 = scmp.ne.s32.totalorder %s110, %s111
    %p123 = scmp.eq.s32.totalorder %s17, 1
    %p124 = por %p122, %p123
    %p126 = scmp.ne.s32.totalorder %s111, %s125
    %p127 = scmp.eq.s32.totalorder %s17, 0
    %p128 = por %p126, %p127
    %s129 = ssub.s32 %s11, %s18
    %p130 = scmp.eq.s32.totalorder %s129, 0
    %s132 = sadd.s32 %s131, 1
    %s133 = scalar_select %p130, %s131, %s132
    %p136 = pneg %p130
    %p137 = scmp.eq.s32.totalorder %s11, 1
    %p138 = por %p136, %p137
    %p139 = scmp.ne.s32.totalorder %s131, %s134
    %p140 = scmp.eq.s32.totalorder %s11, 0
    %p141 = por %p139, %p140
    %p142 = scmp.ne.s32.totalorder %s131, %s134
    %p143 = scmp.eq.s32.totalorder %s16, 1
    %p144 = por %p142, %p143
    %p145 = scmp.ne.s32.totalorder %s134, %s135
    %p146 = scmp.eq.s32.totalorder %s16, 0
    %p147 = por %p145, %p146
    %p148 = scmp.ne.s32.totalorder %s134, %s135
    %p149 = scmp.eq.s32.totalorder %s17, 1
    %p150 = por %p148, %p149
    %p152 = scmp.ne.s32.totalorder %s135, %s151
    %p153 = scmp.eq.s32.totalorder %s17, 0
    %p154 = por %p152, %p153
    %p155 = scmp.le.s32.totalorder 1, %s11
    %p156 = scmp.lt.s32.totalorder %s11, 3
    %p157 = pnand %p155, %p156
    %p158 = pneg %p157
    // Predicated region
    $region9: #{tpu_custom_call.1} parent=5 // pred_check
      _
    $region10: #{tpu_custom_call.1} parent=5 // pred_check_branch
      %160 = sbr.rel (%p157) target = $region12
    $region11: #{tpu_custom_call.1} parent=5 // pred_region
      %s161 = ssub.s32 %s11, 1
      // Predicated region
      $region13: #{tpu_custom_call.1} parent=11 // pred_check
        %p162 = pneg %p58
      $region14: #{tpu_custom_call.1} parent=11 // pred_check_branch
        %164 = sbr.rel (%p162) target = $region16
      $region15: #{tpu_custom_call.1} parent=11 // pred_region
        _
      $region16: #{tpu_custom_call.1} parent=11 // pred_fallthru
        _
      // Predicated region
      $region17: #{tpu_custom_call.1} parent=11 // pred_check
        %p165 = pneg %p79
      $region18: #{tpu_custom_call.1} parent=11 // pred_check_branch
        %167 = sbr.rel (%p165) target = $region20
      $region19: #{tpu_custom_call.1} parent=11 // pred_region
        _
      $region20: #{tpu_custom_call.1} parent=11 // pred_fallthru
        _
      // Predicated region
      $region21: #{tpu_custom_call.1} parent=11 // pred_check
        %p168 = pneg %p100
      $region22: #{tpu_custom_call.1} parent=11 // pred_check_branch
        %170 = sbr.rel (%p168) target = $region24
      $region23: #{tpu_custom_call.1} parent=11 // pred_region
        _
      $region24: #{tpu_custom_call.1} parent=11 // pred_fallthru
        _
      // Predicated region
      $region25: #{tpu_custom_call.1} parent=11 // pred_check
        %p171 = pneg %p121
      $region26: #{tpu_custom_call.1} parent=11 // pred_check_branch
        %173 = sbr.rel (%p171) target = $region28
      $region27: #{tpu_custom_call.1} parent=11 // pred_region
        _
      $region28: #{tpu_custom_call.1} parent=11 // pred_fallthru
        _
    $region12: #{tpu_custom_call.1} parent=5 // pred_fallthru
      _
    %p174 = scmp.lt.s32.totalorder %s11, 2
    // Predicated region
    $region29: #{tpu_custom_call.1} parent=5 // pred_check
      %p175 = pneg %p174
    $region30: #{tpu_custom_call.1} parent=5 // pred_check_branch
      %177 = sbr.rel (%p175) target = $region32
    $region31: #{tpu_custom_call.1} parent=5 // pred_region
      // Predicated region
      $region33: #{tpu_custom_call.1} parent=31 // pred_check
        %p178 = pneg %p31
      $region34: #{tpu_custom_call.1} parent=31 // pred_check_branch
        %180 = sbr.rel (%p178) target = $region36
      $region35: #{tpu_custom_call.1} parent=31 // pred_region
        %p181 = scmp.lt.s32.totalorder %s11, 1
        %s182 = scalar_select %p181, %s11, 1
        %s183 = smul.addr %s182, 32
        %s184 = smul.addr %s183, 8
        %s185 = scalar_lea.vmem %s0, %s184
      $region36: #{tpu_custom_call.1} parent=31 // pred_fallthru
        _
    $region32: #{tpu_custom_call.1} parent=5 // pred_fallthru
      _
    %p186 = scmp.le.s32.totalorder 1, %s11
    %p187 = scmp.lt.s32.totalorder %s11, 3
    %p188 = pnand %p186, %p187
    %p189 = pneg %p188
    // Predicated region
    $region37: #{tpu_custom_call.1} parent=5 // pred_check
      _
    $region38: #{tpu_custom_call.1} parent=5 // pred_check_branch
      %191 = sbr.rel (%p188) target = $region40
    $region39: #{tpu_custom_call.1} parent=5 // pred_region
      %s192 = ssub.s32 %s11, 1
      %p193 = scmp.lt.s32.totalorder %s16, 1
      %s194 = scalar_select %p193, %s16, 1
      %s195 = smul.addr %s194, 32
      %s196 = smul.addr %s195, 8
      %s197 = scalar_lea.vmem %s0, %s196
      %p198 = pneg %p37
      %p199 = pneg %p34
      %p200 = pneg %p58
      %p201 = pneg %p55
      %p202 = pneg %p79
      %p203 = pneg %p76
      %p204 = pneg %p100
      %p205 = pneg %p97
      %p206 = pneg %p121
      %p207 = pneg %p118
      %p208 = pneg %p147
      %p209 = pneg %p144
      %p210 = scmp.lt.s32.totalorder %s16, 1
      %s211 = scalar_select %p210, %s16, 1
      %s212 = smul.addr %s211, 32
      %s213 = smul.addr %s212, 8
      %s214 = scalar_lea.vmem %s5, %s213
      %p215 = scmp.lt.s32.totalorder %s16, 1
      %s216 = scalar_select %p215, %s16, 1
      %s217 = smul.addr %s216, 32
      %s218 = smul.addr %s217, 8
      %s219 = scalar_lea.vmem %s0, %s218
      %p220 = scmp.lt.s32.totalorder %s16, 1
      %s221 = scalar_select %p220, %s16, 1
      %s222 = smul.addr %s221, 32
      %s223 = smul.addr %s222, 8
      %s224 = scalar_lea.vmem %s5, %s223
      %v226 = vld [vmem:[%s219] sm:$0xff]
      %v227 = vld [vmem:[%s219 + $0x8] sm:$0xff]
      %v228 = vld [vmem:[%s219 + $0x10] sm:$0xff]
      %v229 = vld [vmem:[%s219 + $0x18] sm:$0xff]
      %v230 = vld [vmem:[%s219 + $0x20] sm:$0xff]
      %v231 = vld [vmem:[%s219 + $0x28] sm:$0xff]
      %v232 = vld [vmem:[%s219 + $0x30] sm:$0xff]
      %v233 = vld [vmem:[%s219 + $0x38] sm:$0xff]
      %v234 = vld [vmem:[%s219 + $0x40] sm:$0xff]
      %v235 = vld [vmem:[%s219 + $0x48] sm:$0xff]
      %v236 = vld [vmem:[%s219 + $0x50] sm:$0xff]
      %v237 = vld [vmem:[%s219 + $0x58] sm:$0xff]
      %v238 = vld [vmem:[%s219 + $0x60] sm:$0xff]
      %v239 = vld [vmem:[%s219 + $0x68] sm:$0xff]
      %v240 = vld [vmem:[%s219 + $0x70] sm:$0xff]
      %v241 = vld [vmem:[%s219 + $0x78] sm:$0xff]
      %v242 = vld [vmem:[%s219 + $0x80] sm:$0xff]
      %v243 = vld [vmem:[%s219 + $0x88] sm:$0xff]
      %v244 = vld [vmem:[%s219 + $0x90] sm:$0xff]
      %v245 = vld [vmem:[%s219 + $0x98] sm:$0xff]
      %v246 = vld [vmem:[%s219 + $0xa0] sm:$0xff]
      %v247 = vld [vmem:[%s219 + $0xa8] sm:$0xff]
      %v248 = vld [vmem:[%s219 + $0xb0] sm:$0xff]
      %v249 = vld [vmem:[%s219 + $0xb8] sm:$0xff]
      %v250 = vld [vmem:[%s219 + $0xc0] sm:$0xff]
      %v251 = vld [vmem:[%s219 + $0xc8] sm:$0xff]
      %v252 = vld [vmem:[%s219 + $0xd0] sm:$0xff]
      %v253 = vld [vmem:[%s219 + $0xd8] sm:$0xff]
      %v254 = vld [vmem:[%s219 + $0xe0] sm:$0xff]
      %v255 = vld [vmem:[%s219 + $0xe8] sm:$0xff]
      %v256 = vld [vmem:[%s219 + $0xf0] sm:$0xff]
      %v257 = vld [vmem:[%s219 + $0xf8] sm:$0xff]
      %v258 = vpack.c.bf16 %v227, %v226
      %v259 = vpack.c.bf16 %v229, %v228
      %v260 = vpack.c.bf16 %v231, %v230
      %v261 = vpack.c.bf16 %v233, %v232
      %v262 = vpack.c.bf16 %v235, %v234
      %v263 = vpack.c.bf16 %v237, %v236
      %v264 = vpack.c.bf16 %v239, %v238
      %v265 = vpack.c.bf16 %v241, %v240
      %v266 = vpack.c.bf16 %v243, %v242
      %v267 = vpack.c.bf16 %v245, %v244
      %v268 = vpack.c.bf16 %v247, %v246
      %v269 = vpack.c.bf16 %v249, %v248
      %v270 = vpack.c.bf16 %v251, %v250
      %v271 = vpack.c.bf16 %v253, %v252
      %v272 = vpack.c.bf16 %v255, %v254
      %v273 = vpack.c.bf16 %v257, %v256
      %v274 = vlaneseq
      %v275 = vshrl.u32 %v274, 7
      %v276 = vadd.s32 %v275, 8
      %v277 = vadd.s32 %v275, 16
      %v278 = vadd.s32 %v275, 24
      %v279 = vadd.s32 %v275, 32
      %v280 = vadd.s32 %v275, 40
      %v281 = vadd.s32 %v275, 48
      %v282 = vadd.s32 %v275, 56
      %v283 = vadd.s32 %v275, 64
      %v284 = vadd.s32 %v275, 72
      %v285 = vadd.s32 %v275, 80
      %v286 = vadd.s32 %v275, 88
      %v287 = vadd.s32 %v275, 96
      %v288 = vadd.s32 %v275, 104
      %v289 = vadd.s32 %v275, 112
      %v290 = vadd.s32 %v275, 120
      %v291 = vadd.s32 %v275, 128
      %v292 = vadd.s32 %v275, 136
      %v293 = vadd.s32 %v275, 144
      %v294 = vadd.s32 %v275, 152
      %v295 = vadd.s32 %v275, 160
      %v296 = vadd.s32 %v275, 168
      %v297 = vadd.s32 %v275, 176
      %v298 = vadd.s32 %v275, 184
      %v299 = vadd.s32 %v275, 192
      %v300 = vadd.s32 %v275, 200
      %v301 = vadd.s32 %v275, 208
      %v302 = vadd.s32 %v275, 216
      %v303 = vadd.s32 %v275, 224
      %v304 = vadd.s32 %v275, 232
      %v305 = vadd.s32 %v275, 240
      %v306 = vadd.s32 %v275, 248
      %vm307 = vcmp.lt.s32.totalorder %v275, 0
      %v308 = vsub.s32 0, %v275
      %v309 = vsel %vm307, %v308, %v275
      %v310 = vshrl.u32 %v309, 4
      %v311 = vand.u32 %v309, 15
      %v312 = vsub.s32 0, %v311
      %v313 = vsel %vm307, %v312, %v311
      %vm314 = vcmp.lt.s32.totalorder %v276, 0
      %v315 = vsub.s32 0, %v276
      %v316 = vsel %vm314, %v315, %v276
      %v317 = vshrl.u32 %v316, 4
      %v318 = vand.u32 %v316, 15
      %v319 = vsub.s32 0, %v318
      %v320 = vsel %vm314, %v319, %v318
      %vm321 = vcmp.lt.s32.totalorder %v277, 0
      %v322 = vsub.s32 0, %v277
      %v323 = vsel %vm321, %v322, %v277
      %v324 = vshrl.u32 %v323, 4
      %v325 = vand.u32 %v323, 15
      %v326 = vsub.s32 0, %v325
      %v327 = vsel %vm321, %v326, %v325
      %vm328 = vcmp.lt.s32.totalorder %v278, 0
      %v329 = vsub.s32 0, %v278
      %v330 = vsel %vm328, %v329, %v278
      %v331 = vshrl.u32 %v330, 4
      %v332 = vand.u32 %v330, 15
      %v333 = vsub.s32 0, %v332
      %v334 = vsel %vm328, %v333, %v332
      %vm335 = vcmp.lt.s32.totalorder %v279, 0
      %v336 = vsub.s32 0, %v279
      %v337 = vsel %vm335, %v336, %v279
      %v338 = vshrl.u32 %v337, 4
      %v339 = vand.u32 %v337, 15
      %v340 = vsub.s32 0, %v339
      %v341 = vsel %vm335, %v340, %v339
      %vm342 = vcmp.lt.s32.totalorder %v280, 0
      %v343 = vsub.s32 0, %v280
      %v344 = vsel %vm342, %v343, %v280
      %v345 = vshrl.u32 %v344, 4
      %v346 = vand.u32 %v344, 15
      %v347 = vsub.s32 0, %v346
      %v348 = vsel %vm342, %v347, %v346
      %vm349 = vcmp.lt.s32.totalorder %v281, 0
      %v350 = vsub.s32 0, %v281
      %v351 = vsel %vm349, %v350, %v281
      %v352 = vshrl.u32 %v351, 4
      %v353 = vand.u32 %v351, 15
      %v354 = vsub.s32 0, %v353
      %v355 = vsel %vm349, %v354, %v353
      %vm356 = vcmp.lt.s32.totalorder %v282, 0
      %v357 = vsub.s32 0, %v282
      %v358 = vsel %vm356, %v357, %v282
      %v359 = vshrl.u32 %v358, 4
      %v360 = vand.u32 %v358, 15
      %v361 = vsub.s32 0, %v360
      %v362 = vsel %vm356, %v361, %v360
      %vm363 = vcmp.lt.s32.totalorder %v283, 0
      %v364 = vsub.s32 0, %v283
      %v365 = vsel %vm363, %v364, %v283
      %v366 = vshrl.u32 %v365, 4
      %v367 = vand.u32 %v365, 15
      %v368 = vsub.s32 0, %v367
      %v369 = vsel %vm363, %v368, %v367
      %vm370 = vcmp.lt.s32.totalorder %v284, 0
      %v371 = vsub.s32 0, %v284
      %v372 = vsel %vm370, %v371, %v284
      %v373 = vshrl.u32 %v372, 4
      %v374 = vand.u32 %v372, 15
      %v375 = vsub.s32 0, %v374
      %v376 = vsel %vm370, %v375, %v374
      %vm377 = vcmp.lt.s32.totalorder %v285, 0
      %v378 = vsub.s32 0, %v285
      %v379 = vsel %vm377, %v378, %v285
      %v380 = vshrl.u32 %v379, 4
      %v381 = vand.u32 %v379, 15
      %v382 = vsub.s32 0, %v381
      %v383 = vsel %vm377, %v382, %v381
      %vm384 = vcmp.lt.s32.totalorder %v286, 0
      %v385 = vsub.s32 0, %v286
      %v386 = vsel %vm384, %v385, %v286
      %v387 = vshrl.u32 %v386, 4
      %v388 = vand.u32 %v386, 15
      %v389 = vsub.s32 0, %v388
      %v390 = vsel %vm384, %v389, %v388
      %vm391 = vcmp.lt.s32.totalorder %v287, 0
      %v392 = vsub.s32 0, %v287
      %v393 = vsel %vm391, %v392, %v287
      %v394 = vshrl.u32 %v393, 4
      %v395 = vand.u32 %v393, 15
      %v396 = vsub.s32 0, %v395
      %v397 = vsel %vm391, %v396, %v395
      %vm398 = vcmp.lt.s32.totalorder %v288, 0
      %v399 = vsub.s32 0, %v288
      %v400 = vsel %vm398, %v399, %v288
      %v401 = vshrl.u32 %v400, 4
      %v402 = vand.u32 %v400, 15
      %v403 = vsub.s32 0, %v402
      %v404 = vsel %vm398, %v403, %v402
      %vm405 = vcmp.lt.s32.totalorder %v289, 0
      %v406 = vsub.s32 0, %v289
      %v407 = vsel %vm405, %v406, %v289
      %v408 = vshrl.u32 %v407, 4
      %v409 = vand.u32 %v407, 15
      %v410 = vsub.s32 0, %v409
      %v411 = vsel %vm405, %v410, %v409
      %vm412 = vcmp.lt.s32.totalorder %v290, 0
      %v413 = vsub.s32 0, %v290
      %v414 = vsel %vm412, %v413, %v290
      %v415 = vshrl.u32 %v414, 4
      %v416 = vand.u32 %v414, 15
      %v417 = vsub.s32 0, %v416
      %v418 = vsel %vm412, %v417, %v416
      %vm419 = vcmp.lt.s32.totalorder %v291, 0
      %v420 = vsub.s32 0, %v291
      %v421 = vsel %vm419, %v420, %v291
      %v422 = vshrl.u32 %v421, 4
      %v423 = vand.u32 %v421, 15
      %v424 = vsub.s32 0, %v423
      %v425 = vsel %vm419, %v424, %v423
      %vm426 = vcmp.lt.s32.totalorder %v292, 0
      %v427 = vsub.s32 0, %v292
      %v428 = vsel %vm426, %v427, %v292
      %v429 = vshrl.u32 %v428, 4
      %v430 = vand.u32 %v428, 15
      %v431 = vsub.s32 0, %v430
      %v432 = vsel %vm426, %v431, %v430
      %vm433 = vcmp.lt.s32.totalorder %v293, 0
      %v434 = vsub.s32 0, %v293
      %v435 = vsel %vm433, %v434, %v293
      %v436 = vshrl.u32 %v435, 4
      %v437 = vand.u32 %v435, 15
      %v438 = vsub.s32 0, %v437
      %v439 = vsel %vm433, %v438, %v437
      %vm440 = vcmp.lt.s32.totalorder %v294, 0
      %v441 = vsub.s32 0, %v294
      %v442 = vsel %vm440, %v441, %v294
      %v443 = vshrl.u32 %v442, 4
      %v444 = vand.u32 %v442, 15
      %v445 = vsub.s32 0, %v444
      %v446 = vsel %vm440, %v445, %v444
      %vm447 = vcmp.lt.s32.totalorder %v295, 0
      %v448 = vsub.s32 0, %v295
      %v449 = vsel %vm447, %v448, %v295
      %v450 = vshrl.u32 %v449, 4
      %v451 = vand.u32 %v449, 15
      %v452 = vsub.s32 0, %v451
      %v453 = vsel %vm447, %v452, %v451
      %vm454 = vcmp.lt.s32.totalorder %v296, 0
      %v455 = vsub.s32 0, %v296
      %v456 = vsel %vm454, %v455, %v296
      %v457 = vshrl.u32 %v456, 4
      %v458 = vand.u32 %v456, 15
      %v459 = vsub.s32 0, %v458
      %v460 = vsel %vm454, %v459, %v458
      %vm461 = vcmp.lt.s32.totalorder %v297, 0
      %v462 = vsub.s32 0, %v297
      %v463 = vsel %vm461, %v462, %v297
      %v464 = vshrl.u32 %v463, 4
      %v465 = vand.u32 %v463, 15
      %v466 = vsub.s32 0, %v465
      %v467 = vsel %vm461, %v466, %v465
      %vm468 = vcmp.lt.s32.totalorder %v298, 0
      %v469 = vsub.s32 0, %v298
      %v470 = vsel %vm468, %v469, %v298
      %v471 = vshrl.u32 %v470, 4
      %v472 = vand.u32 %v470, 15
      %v473 = vsub.s32 0, %v472
      %v474 = vsel %vm468, %v473, %v472
      %vm475 = vcmp.lt.s32.totalorder %v299, 0
      %v476 = vsub.s32 0, %v299
      %v477 = vsel %vm475, %v476, %v299
      %v478 = vshrl.u32 %v477, 4
      %v479 = vand.u32 %v477, 15
      %v480 = vsub.s32 0, %v479
      %v481 = vsel %vm475, %v480, %v479
      %vm482 = vcmp.lt.s32.totalorder %v300, 0
      %v483 = vsub.s32 0, %v300
      %v484 = vsel %vm482, %v483, %v300
      %v485 = vshrl.u32 %v484, 4
      %v486 = vand.u32 %v484, 15
      %v487 = vsub.s32 0, %v486
      %v488 = vsel %vm482, %v487, %v486
      %vm489 = vcmp.lt.s32.totalorder %v301, 0
      %v490 = vsub.s32 0, %v301
      %v491 = vsel %vm489, %v490, %v301
      %v492 = vshrl.u32 %v491, 4
      %v493 = vand.u32 %v491, 15
      %v494 = vsub.s32 0, %v493
      %v495 = vsel %vm489, %v494, %v493
      %vm496 = vcmp.lt.s32.totalorder %v302, 0
      %v497 = vsub.s32 0, %v302
      %v498 = vsel %vm496, %v497, %v302
      %v499 = vshrl.u32 %v498, 4
      %v500 = vand.u32 %v498, 15
      %v501 = vsub.s32 0, %v500
      %v502 = vsel %vm496, %v501, %v500
      %vm503 = vcmp.lt.s32.totalorder %v303, 0
      %v504 = vsub.s32 0, %v303
      %v505 = vsel %vm503, %v504, %v303
      %v506 = vshrl.u32 %v505, 4
      %v507 = vand.u32 %v505, 15
      %v508 = vsub.s32 0, %v507
      %v509 = vsel %vm503, %v508, %v507
      %vm510 = vcmp.lt.s32.totalorder %v304, 0
      %v511 = vsub.s32 0, %v304
      %v512 = vsel %vm510, %v511, %v304
      %v513 = vshrl.u32 %v512, 4
      %v514 = vand.u32 %v512, 15
      %v515 = vsub.s32 0, %v514
      %v516 = vsel %vm510, %v515, %v514
      %vm517 = vcmp.lt.s32.totalorder %v305, 0
      %v518 = vsub.s32 0, %v305
      %v519 = vsel %vm517, %v518, %v305
      %v520 = vshrl.u32 %v519, 4
      %v521 = vand.u32 %v519, 15
      %v522 = vsub.s32 0, %v521
      %v523 = vsel %vm517, %v522, %v521
      %vm524 = vcmp.lt.s32.totalorder %v306, 0
      %v525 = vsub.s32 0, %v306
      %v526 = vsel %vm524, %v525, %v306
      %v527 = vshrl.u32 %v526, 4
      %v528 = vand.u32 %v526, 15
      %v529 = vsub.s32 0, %v528
      %v530 = vsel %vm524, %v529, %v528
      %vm531 = vcmp.ne.s32.totalorder %v313, 0
      %vm532 = vcmp.ne.s32.totalorder %v320, 0
      %vm533 = vcmp.ne.s32.totalorder %v327, 0
      %vm534 = vcmp.ne.s32.totalorder %v334, 0
      %vm535 = vcmp.ne.s32.totalorder %v341, 0
      %vm536 = vcmp.ne.s32.totalorder %v348, 0
      %vm537 = vcmp.ne.s32.totalorder %v355, 0
      %vm538 = vcmp.ne.s32.totalorder %v362, 0
      %vm539 = vcmp.ne.s32.totalorder %v369, 0
      %vm540 = vcmp.ne.s32.totalorder %v376, 0
      %vm541 = vcmp.ne.s32.totalorder %v383, 0
      %vm542 = vcmp.ne.s32.totalorder %v390, 0
      %vm543 = vcmp.ne.s32.totalorder %v397, 0
      %vm544 = vcmp.ne.s32.totalorder %v404, 0
      %vm545 = vcmp.ne.s32.totalorder %v411, 0
      %vm546 = vcmp.ne.s32.totalorder %v418, 0
      %vm547 = vcmp.ne.s32.totalorder %v425, 0
      %vm548 = vcmp.ne.s32.totalorder %v432, 0
      %vm549 = vcmp.ne.s32.totalorder %v439, 0
      %vm550 = vcmp.ne.s32.totalorder %v446, 0
      %vm551 = vcmp.ne.s32.totalorder %v453, 0
      %vm552 = vcmp.ne.s32.totalorder %v460, 0
      %vm553 = vcmp.ne.s32.totalorder %v467, 0
      %vm554 = vcmp.ne.s32.totalorder %v474, 0
      %vm555 = vcmp.ne.s32.totalorder %v481, 0
      %vm556 = vcmp.ne.s32.totalorder %v488, 0
      %vm557 = vcmp.ne.s32.totalorder %v495, 0
      %vm558 = vcmp.ne.s32.totalorder %v502, 0
      %vm559 = vcmp.ne.s32.totalorder %v509, 0
      %vm560 = vcmp.ne.s32.totalorder %v516, 0
      %vm561 = vcmp.ne.s32.totalorder %v523, 0
      %vm562 = vcmp.ne.s32.totalorder %v530, 0
      %vm563 = vcmp.lt.s32.totalorder %v313, 0
      %vm564 = vcmp.lt.s32.totalorder %v320, 0
      %vm565 = vcmp.lt.s32.totalorder %v327, 0
      %vm566 = vcmp.lt.s32.totalorder %v334, 0
      %vm567 = vcmp.lt.s32.totalorder %v341, 0
      %vm568 = vcmp.lt.s32.totalorder %v348, 0
      %vm569 = vcmp.lt.s32.totalorder %v355, 0
      %vm570 = vcmp.lt.s32.totalorder %v362, 0
      %vm571 = vcmp.lt.s32.totalorder %v369, 0
      %vm572 = vcmp.lt.s32.totalorder %v376, 0
      %vm573 = vcmp.lt.s32.totalorder %v383, 0
      %vm574 = vcmp.lt.s32.totalorder %v390, 0
      %vm575 = vcmp.lt.s32.totalorder %v397, 0
      %vm576 = vcmp.lt.s32.totalorder %v404, 0
      %vm577 = vcmp.lt.s32.totalorder %v411, 0
      %vm578 = vcmp.lt.s32.totalorder %v418, 0
      %vm579 = vcmp.lt.s32.totalorder %v425, 0
      %vm580 = vcmp.lt.s32.totalorder %v432, 0
      %vm581 = vcmp.lt.s32.totalorder %v439, 0
      %vm582 = vcmp.lt.s32.totalorder %v446, 0
      %vm583 = vcmp.lt.s32.totalorder %v453, 0
      %vm584 = vcmp.lt.s32.totalorder %v460, 0
      %vm585 = vcmp.lt.s32.totalorder %v467, 0
      %vm586 = vcmp.lt.s32.totalorder %v474, 0
      %vm587 = vcmp.lt.s32.totalorder %v481, 0
      %vm588 = vcmp.lt.s32.totalorder %v488, 0
      %vm589 = vcmp.lt.s32.totalorder %v495, 0
      %vm590 = vcmp.lt.s32.totalorder %v502, 0
      %vm591 = vcmp.lt.s32.totalorder %v509, 0
      %vm592 = vcmp.lt.s32.totalorder %v516, 0
      %vm593 = vcmp.lt.s32.totalorder %v523, 0
      %vm594 = vcmp.lt.s32.totalorder %v530, 0
      %vm595 = vmand %vm563, %vm531
      %vm596 = vmand %vm564, %vm532
      %vm597 = vmand %vm565, %vm533
      %vm598 = vmand %vm566, %vm534
      %vm599 = vmand %vm567, %vm535
      %vm600 = vmand %vm568, %vm536
      %vm601 = vmand %vm569, %vm537
      %vm602 = vmand %vm570, %vm538
      %vm603 = vmand %vm571, %vm539
      %vm604 = vmand %vm572, %vm540
      %vm605 = vmand %vm573, %vm541
      %vm606 = vmand %vm574, %vm542
      %vm607 = vmand %vm575, %vm543
      %vm608 = vmand %vm576, %vm544
      %vm609 = vmand %vm577, %vm545
      %vm610 = vmand %vm578, %vm546
      %vm611 = vmand %vm579, %vm547
      %vm612 = vmand %vm580, %vm548
      %vm613 = vmand %vm581, %vm549
      %vm614 = vmand %vm582, %vm550
      %vm615 = vmand %vm583, %vm551
      %vm616 = vmand %vm584, %vm552
      %vm617 = vmand %vm585, %vm553
      %vm618 = vmand %vm586, %vm554
      %vm619 = vmand %vm587, %vm555
      %vm620 = vmand %vm588, %vm556
      %vm621 = vmand %vm589, %vm557
      %vm622 = vmand %vm590, %vm558
      %vm623 = vmand %vm591, %vm559
      %vm624 = vmand %vm592, %vm560
      %vm625 = vmand %vm593, %vm561
      %vm626 = vmand %vm594, %vm562
      %v627 = vadd.s32 %v313, 16
      %v628 = vadd.s32 %v320, 16
      %v629 = vadd.s32 %v327, 16
      %v630 = vadd.s32 %v334, 16
      %v631 = vadd.s32 %v341, 16
      %v632 = vadd.s32 %v348, 16
      %v633 = vadd.s32 %v355, 16
      %v634 = vadd.s32 %v362, 16
      %v635 = vadd.s32 %v369, 16
      %v636 = vadd.s32 %v376, 16
      %v637 = vadd.s32 %v383, 16
      %v638 = vadd.s32 %v390, 16
      %v639 = vadd.s32 %v397, 16
      %v640 = vadd.s32 %v404, 16
      %v641 = vadd.s32 %v411, 16
      %v642 = vadd.s32 %v418, 16
      %v643 = vadd.s32 %v425, 16
      %v644 = vadd.s32 %v432, 16
      %v645 = vadd.s32 %v439, 16
      %v646 = vadd.s32 %v446, 16
      %v647 = vadd.s32 %v453, 16
      %v648 = vadd.s32 %v460, 16
      %v649 = vadd.s32 %v467, 16
      %v650 = vadd.s32 %v474, 16
      %v651 = vadd.s32 %v481, 16
      %v652 = vadd.s32 %v488, 16
      %v653 = vadd.s32 %v495, 16
      %v654 = vadd.s32 %v502, 16
      %v655 = vadd.s32 %v509, 16
      %v656 = vadd.s32 %v516, 16
      %v657 = vadd.s32 %v523, 16
      %v658 = vadd.s32 %v530, 16
      %v659 = vsel %vm595, %v627, %v313
      %v660 = vsel %vm596, %v628, %v320
      %v661 = vsel %vm597, %v629, %v327
      %v662 = vsel %vm598, %v630, %v334
      %v663 = vsel %vm599, %v631, %v341
      %v664 = vsel %vm600, %v632, %v348
      %v665 = vsel %vm601, %v633, %v355
      %v666 = vsel %vm602, %v634, %v362
      %v667 = vsel %vm603, %v635, %v369
      %v668 = vsel %vm604, %v636, %v376
      %v669 = vsel %vm605, %v637, %v383
      %v670 = vsel %vm606, %v638, %v390
      %v671 = vsel %vm607, %v639, %v397
      %v672 = vsel %vm608, %v640, %v404
      %v673 = vsel %vm609, %v641, %v411
      %v674 = vsel %vm610, %v642, %v418
      %v675 = vsel %vm611, %v643, %v425
      %v676 = vsel %vm612, %v644, %v432
      %v677 = vsel %vm613, %v645, %v439
      %v678 = vsel %vm614, %v646, %v446
      %v679 = vsel %vm615, %v647, %v453
      %v680 = vsel %vm616, %v648, %v460
      %v681 = vsel %vm617, %v649, %v467
      %v682 = vsel %vm618, %v650, %v474
      %v683 = vsel %vm619, %v651, %v481
      %v684 = vsel %vm620, %v652, %v488
      %v685 = vsel %vm621, %v653, %v495
      %v686 = vsel %vm622, %v654, %v502
      %v687 = vsel %vm623, %v655, %v509
      %v688 = vsel %vm624, %v656, %v516
      %v689 = vsel %vm625, %v657, %v523
      %v690 = vsel %vm626, %v658, %v530
      %vm691 = vcmp.ge.s32.totalorder %v659, 1
      %vm692 = vcmp.ge.s32.totalorder %v660, 1
      %vm693 = vcmp.ge.s32.totalorder %v661, 1
      %vm694 = vcmp.ge.s32.totalorder %v662, 1
      %vm695 = vcmp.ge.s32.totalorder %v663, 1
      %vm696 = vcmp.ge.s32.totalorder %v664, 1
      %vm697 = vcmp.ge.s32.totalorder %v665, 1
      %vm698 = vcmp.ge.s32.totalorder %v666, 1
      %vm699 = vcmp.ge.s32.totalorder %v667, 1
      %vm700 = vcmp.ge.s32.totalorder %v668, 1
      %vm701 = vcmp.ge.s32.totalorder %v669, 1
      %vm702 = vcmp.ge.s32.totalorder %v670, 1
      %vm703 = vcmp.ge.s32.totalorder %v671, 1
      %vm704 = vcmp.ge.s32.totalorder %v672, 1
      %vm705 = vcmp.ge.s32.totalorder %v673, 1
      %vm706 = vcmp.ge.s32.totalorder %v674, 1
      %vm707 = vcmp.ge.s32.totalorder %v675, 1
      %vm708 = vcmp.ge.s32.totalorder %v676, 1
      %vm709 = vcmp.ge.s32.totalorder %v677, 1
      %vm710 = vcmp.ge.s32.totalorder %v678, 1
      %vm711 = vcmp.ge.s32.totalorder %v679, 1
      %vm712 = vcmp.ge.s32.totalorder %v680, 1
      %vm713 = vcmp.ge.s32.totalorder %v681, 1
      %vm714 = vcmp.ge.s32.totalorder %v682, 1
      %vm715 = vcmp.ge.s32.totalorder %v683, 1
      %vm716 = vcmp.ge.s32.totalorder %v684, 1
      %vm717 = vcmp.ge.s32.totalorder %v685, 1
      %vm718 = vcmp.ge.s32.totalorder %v686, 1
      %vm719 = vcmp.ge.s32.totalorder %v687, 1
      %vm720 = vcmp.ge.s32.totalorder %v688, 1
      %vm721 = vcmp.ge.s32.totalorder %v689, 1
      %vm722 = vcmp.ge.s32.totalorder %v690, 1
      %vm723 = vcmp.le.s32.totalorder %v659, 14
      %vm724 = vcmp.le.s32.totalorder %v660, 14
      %vm725 = vcmp.le.s32.totalorder %v661, 14
      %vm726 = vcmp.le.s32.totalorder %v662, 14
      %vm727 = vcmp.le.s32.totalorder %v663, 14
      %vm728 = vcmp.le.s32.totalorder %v664, 14
      %vm729 = vcmp.le.s32.totalorder %v665, 14
      %vm730 = vcmp.le.s32.totalorder %v666, 14
      %vm731 = vcmp.le.s32.totalorder %v667, 14
      %vm732 = vcmp.le.s32.totalorder %v668, 14
      %vm733 = vcmp.le.s32.totalorder %v669, 14
      %vm734 = vcmp.le.s32.totalorder %v670, 14
      %vm735 = vcmp.le.s32.totalorder %v671, 14
      %vm736 = vcmp.le.s32.totalorder %v672, 14
      %vm737 = vcmp.le.s32.totalorder %v673, 14
      %vm738 = vcmp.le.s32.totalorder %v674, 14
      %vm739 = vcmp.le.s32.totalorder %v675, 14
      %vm740 = vcmp.le.s32.totalorder %v676, 14
      %vm741 = vcmp.le.s32.totalorder %v677, 14
      %vm742 = vcmp.le.s32.totalorder %v678, 14
      %vm743 = vcmp.le.s32.totalorder %v679, 14
      %vm744 = vcmp.le.s32.totalorder %v680, 14
      %vm745 = vcmp.le.s32.totalorder %v681, 14
      %vm746 = vcmp.le.s32.totalorder %v682, 14
      %vm747 = vcmp.le.s32.totalorder %v683, 14
      %vm748 = vcmp.le.s32.totalorder %v684, 14
      %vm749 = vcmp.le.s32.totalorder %v685, 14
      %vm750 = vcmp.le.s32.totalorder %v686, 14
      %vm751 = vcmp.le.s32.totalorder %v687, 14
      %vm752 = vcmp.le.s32.totalorder %v688, 14
      %vm753 = vcmp.le.s32.totalorder %v689, 14
      %vm754 = vcmp.le.s32.totalorder %v690, 14
      %v755 = vld [vmem:[%s2] sm:$0x1]
      %v756 = vld [vmem:[%s4] sm:$0x1]
      %773 = vrot.lane.b32.xlu0 %v258, 32
      %v774 = vpop.permute.xlu0 %773
      %775 = vrot.lane.b32.xlu0 %v259, 32
      %v776 = vpop.permute.xlu0 %775
      %777 = vrot.lane.b32.xlu0 %v260, 32
      %v778 = vpop.permute.xlu0 %777
      %779 = vrot.lane.b32.xlu0 %v261, 32
      %v780 = vpop.permute.xlu0 %779
      %781 = vrot.lane.b32.xlu0 %v262, 32
      %v782 = vpop.permute.xlu0 %781
      %783 = vrot.lane.b32.xlu0 %v263, 32
      %v784 = vpop.permute.xlu0 %783
      %785 = vrot.lane.b32.xlu0 %v264, 32
      %v786 = vpop.permute.xlu0 %785
      %787 = vrot.lane.b32.xlu0 %v265, 32
      %v788 = vpop.permute.xlu0 %787
      %789 = vrot.lane.b32.xlu0 %v266, 32
      %v790 = vpop.permute.xlu0 %789
      %791 = vrot.lane.b32.xlu0 %v267, 32
      %v792 = vpop.permute.xlu0 %791
      %793 = vrot.lane.b32.xlu0 %v268, 32
      %v794 = vpop.permute.xlu0 %793
      %795 = vrot.lane.b32.xlu0 %v269, 32
      %v796 = vpop.permute.xlu0 %795
      %797 = vrot.lane.b32.xlu0 %v270, 32
      %v798 = vpop.permute.xlu0 %797
      %799 = vrot.lane.b32.xlu0 %v271, 32
      %v800 = vpop.permute.xlu0 %799
      %801 = vrot.lane.b32.xlu0 %v272, 32
      %v802 = vpop.permute.xlu0 %801
      %803 = vrot.lane.b32.xlu0 %v273, 32
      %v804 = vpop.permute.xlu0 %803
      %806 = vrot.lane.b32.xlu0 %v259, 64
      %v807 = vpop.permute.xlu0 %806
      %808 = vrot.lane.b32.xlu0 %v260, 64
      %v809 = vpop.permute.xlu0 %808
      %810 = vrot.lane.b32.xlu0 %v261, 64
      %v811 = vpop.permute.xlu0 %810
      %812 = vrot.lane.b32.xlu0 %v262, 64
      %v813 = vpop.permute.xlu0 %812
      %814 = vrot.lane.b32.xlu0 %v263, 64
      %v815 = vpop.permute.xlu0 %814
      %816 = vrot.lane.b32.xlu0 %v264, 64
      %v817 = vpop.permute.xlu0 %816
      %818 = vrot.lane.b32.xlu0 %v265, 64
      %v819 = vpop.permute.xlu0 %818
      %820 = vrot.lane.b32.xlu0 %v266, 64
      %v821 = vpop.permute.xlu0 %820
      %822 = vrot.lane.b32.xlu0 %v267, 64
      %v823 = vpop.permute.xlu0 %822
      %824 = vrot.lane.b32.xlu0 %v268, 64
      %v825 = vpop.permute.xlu0 %824
      %826 = vrot.lane.b32.xlu0 %v269, 64
      %v827 = vpop.permute.xlu0 %826
      %828 = vrot.lane.b32.xlu0 %v270, 64
      %v829 = vpop.permute.xlu0 %828
      %830 = vrot.lane.b32.xlu0 %v271, 64
      %v831 = vpop.permute.xlu0 %830
      %832 = vrot.lane.b32.xlu0 %v272, 64
      %v833 = vpop.permute.xlu0 %832
      %834 = vrot.lane.b32.xlu0 %v273, 64
      %v835 = vpop.permute.xlu0 %834
      %836 = vrot.lane.b32.xlu0 0, 64
      %v837 = vpop.permute.xlu0 %836
      %vm838 = vcmask 261120
      %v841 = vsel %vm838, 0, %v774
      %v844 = vsel %vm838, %v258, %v776
      %v847 = vsel %vm838, %v259, %v778
      %v850 = vsel %vm838, %v260, %v780
      %v853 = vsel %vm838, %v261, %v782
      %v856 = vsel %vm838, %v262, %v784
      %v859 = vsel %vm838, %v263, %v786
      %v862 = vsel %vm838, %v264, %v788
      %v865 = vsel %vm838, %v265, %v790
      %v868 = vsel %vm838, %v266, %v792
      %v871 = vsel %vm838, %v267, %v794
      %v874 = vsel %vm838, %v268, %v796
      %v877 = vsel %vm838, %v269, %v798
      %v880 = vsel %vm838, %v270, %v800
      %v883 = vsel %vm838, %v271, %v802
      %v886 = vsel %vm838, %v272, %v804
      %vm887 = vcmask 523264
      %v889 = vsel %vm887, %v841, %v807
      %v891 = vsel %vm887, %v844, %v809
      %v893 = vsel %vm887, %v847, %v811
      %v895 = vsel %vm887, %v850, %v813
      %v897 = vsel %vm887, %v853, %v815
      %v899 = vsel %vm887, %v856, %v817
      %v901 = vsel %vm887, %v859, %v819
      %v903 = vsel %vm887, %v862, %v821
      %v905 = vsel %vm887, %v865, %v823
      %v907 = vsel %vm887, %v868, %v825
      %v909 = vsel %vm887, %v871, %v827
      %v911 = vsel %vm887, %v874, %v829
      %v913 = vsel %vm887, %v877, %v831
      %v915 = vsel %vm887, %v880, %v833
      %v917 = vsel %vm887, %v883, %v835
      %v919 = vsel %vm887, %v886, %v837
      %v920 = vld [vmem:[%s1] sm:$0xf]
      %v921 = vld [vmem:[%s1 + $0x4] sm:$0xf]
      %v922 = vld [vmem:[%s1 + $0x8] sm:$0xf]
      %v923 = vld [vmem:[%s1 + $0xc] sm:$0xf]
      %v924 = vld [vmem:[%s1 + $0x10] sm:$0xf]
      %v925 = vld [vmem:[%s1 + $0x14] sm:$0xf]
      %v926 = vld [vmem:[%s1 + $0x18] sm:$0xf]
      %v927 = vld [vmem:[%s1 + $0x1c] sm:$0xf]
      %v928 = vld [vmem:[%s1 + $0x20] sm:$0xf]
      %v929 = vld [vmem:[%s1 + $0x24] sm:$0xf]
      %v930 = vld [vmem:[%s1 + $0x28] sm:$0xf]
      %v931 = vld [vmem:[%s1 + $0x2c] sm:$0xf]
      %v944 = vunpack.c.l.b16 %v920
      %v945 = vunpack.c.l.b16 %v921
      %v946 = vunpack.c.l.b16 %v922
      %v947 = vunpack.c.l.b16 %v923
      %v948 = vunpack.c.l.b16 %v924
      %v949 = vunpack.c.l.b16 %v925
      %v950 = vunpack.c.l.b16 %v926
      %v951 = vunpack.c.l.b16 %v927
      %v952 = vunpack.c.l.b16 %v928
      %v953 = vunpack.c.l.b16 %v929
      %v954 = vunpack.c.l.b16 %v930
      %v955 = vunpack.c.l.b16 %v931
      %v956 = vpack.c.b16 %v945, %v944
      %v957 = vpack.c.b16 %v947, %v946
      %v958 = vpack.c.b16 %v949, %v948
      %v959 = vpack.c.b16 %v951, %v950
      %v960 = vpack.c.b16 %v953, %v952
      %v961 = vpack.c.b16 %v955, %v954
      %vm968 = vcmask 785408
      %v969 = vsel %vm968, %v889, 0
      %v971 = vsel %vm968, %v891, 0
      %v973 = vsel %vm968, %v893, 0
      %v975 = vsel %vm968, %v895, 0
      %v977 = vsel %vm968, %v897, 0
      %v979 = vsel %vm968, %v899, 0
      %v981 = vsel %vm968, %v901, 0
      %v983 = vsel %vm968, %v903, 0
      %v985 = vsel %vm968, %v905, 0
      %v987 = vsel %vm968, %v907, 0
      %v989 = vsel %vm968, %v909, 0
      %v991 = vsel %vm968, %v911, 0
      %v993 = vsel %vm968, %v913, 0
      %v995 = vsel %vm968, %v915, 0
      %v997 = vsel %vm968, %v917, 0
      %v999 = vsel %vm968, %v919, 0
      %1001 = vmatprep.subr.bf16.mxu0 0
      %1002 = vmatpush1.bf16.msra.mxu0 %v956
      %1003 = vmatprep.subr.bf16.mxu0 0
      %1004 = vmatpush1.bf16.msra.mxu0 %v957
      %1005 = vmatprep.subr.bf16.mxu0 0
      %1006 = vmatpush1.bf16.msra.mxu0 %v958
      %1007 = vmatprep.subr.bf16.mxu0 0
      %1008 = vmatpush1.bf16.msra.mxu0 %v959
      %1009 = vmatprep.subr.bf16.mxu0 0
      %1010 = vmatpush1.bf16.msra.mxu0 %v960
      %1011 = vmatprep.subr.bf16.mxu0 0
      %1012 = vmatpush1.bf16.msra.mxu0 %v961
      %1013 = vmatprep.subr.bf16.mxu0 0
      %1014 = vmatpush1.bf16.msra.mxu0 0
      %1015 = vmatprep.subr.bf16.mxu0 0
      %1016 = vmatpush1.bf16.msra.mxu0 0
      %1017 = vmatprep.subr.bf16.mxu0 0
      %1018 = vmatpush1.bf16.msra.mxu0 0
      %1019 = vmatprep.subr.bf16.mxu0 0
      %1020 = vmatpush1.bf16.msra.mxu0 0
      %1021 = vmatprep.subr.bf16.mxu0 0
      %1022 = vmatpush1.bf16.msra.mxu0 0
      %1023 = vmatprep.subr.bf16.mxu0 0
      %1024 = vmatpush1.bf16.msra.mxu0 0
      %1025 = vmatprep.subr.bf16.mxu0 0
      %1026 = vmatpush1.bf16.msra.mxu0 0
      %1027 = vmatprep.subr.bf16.mxu0 0
      %1028 = vmatpush1.bf16.msra.mxu0 0
      %1029 = vmatprep.subr.bf16.mxu0 0
      %1030 = vmatpush1.bf16.msra.mxu0 0
      %1031 = vmatprep.subr.bf16.mxu0 0
      %1032 = vmatpush1.bf16.msra.mxu0 0
      %1033 = vmatprep.mubr.bf16.mxu0 0
      %1034 = vmatmul.mubr.bf16.gmra.mrb[0].mxu0 %v969
      %v1035 = vpop.f32.mrb[0].mxu0
      %v1036 = vadd.f32 0.0, %v1035
      %v1037 = vpop.f32.mrb[0].mxu0
      %v1038 = vpop.f32.mrb[0].mxu0
      %v1039 = vadd.f32 0.0, %v1038
      %v1040 = vpop.f32.mrb[0].mxu0
      %1041 = vmatprep.mubr.bf16.mxu0 0
      %1042 = vmatmul.mubr.bf16.gmra.mrb[0].mxu0 %v971
      %v1043 = vpop.f32.mrb[0].mxu0
      %v1044 = vadd.f32 0.0, %v1043
      %v1045 = vpop.f32.mrb[0].mxu0
      %v1046 = vpop.f32.mrb[0].mxu0
      %v1047 = vadd.f32 0.0, %v1046
      %v1048 = vpop.f32.mrb[0].mxu0
      %1049 = vmatprep.mubr.bf16.mxu0 0
      %1050 = vmatmul.mubr.bf16.gmra.mrb[0].mxu0 %v973
      %v1051 = vpop.f32.mrb[0].mxu0
      %v1052 = vadd.f32 0.0, %v1051
      %v1053 = vpop.f32.mrb[0].mxu0
      %v1054 = vpop.f32.mrb[0].mxu0
      %v1055 = vadd.f32 0.0, %v1054
      %v1056 = vpop.f32.mrb[0].mxu0
      %1057 = vmatprep.mubr.bf16.mxu0 0
      %1058 = vmatmul.mubr.bf16.gmra.mrb[0].mxu0 %v975
      %v1059 = vpop.f32.mrb[0].mxu0
      %v1060 = vadd.f32 0.0, %v1059
      %v1061 = vpop.f32.mrb[0].mxu0
      %v1062 = vpop.f32.mrb[0].mxu0
      %v1063 = vadd.f32 0.0, %v1062
      %v1064 = vpop.f32.mrb[0].mxu0
      %1065 = vmatprep.mubr.bf16.mxu0 0
      %1066 = vmatmul.mubr.bf16.gmra.mrb[0].mxu0 %v977
      %v1067 = vpop.f32.mrb[0].mxu0
      %v1068 = vadd.f32 0.0, %v1067
      %v1069 = vpop.f32.mrb[0].mxu0
      %v1070 = vpop.f32.mrb[0].mxu0
      %v1071 = vadd.f32 0.0, %v1070
      %v1072 = vpop.f32.mrb[0].mxu0
      %1073 = vmatprep.mubr.bf16.mxu0 0
      %1074 = vmatmul.mubr.bf16.gmra.mrb[0].mxu0 %v979
      %v1075 = vpop.f32.mrb[0].mxu0
      %v1076 = vadd.f32 0.0, %v1075
      %v1077 = vpop.f32.mrb[0].mxu0
      %v1078 = vpop.f32.mrb[0].mxu0
      %v1079 = vadd.f32 0.0, %v1078
      %v1080 = vpop.f32.mrb[0].mxu0
      %1081 = vmatprep.mubr.bf16.mxu0 0
      %1082 = vmatmul.mubr.bf16.gmra.mrb[0].mxu0 %v981
      %v1083 = vpop.f32.mrb[0].mxu0
      %v1084 = vadd.f32 0.0, %v1083
      %v1085 = vpop.f32.mrb[0].mxu0
      %v1086 = vpop.f32.mrb[0].mxu0
      %v1087 = vadd.f32 0.0, %v1086
      %v1088 = vpop.f32.mrb[0].mxu0
      %1089 = vmatprep.mubr.bf16.mxu0 0
      %1090 = vmatmul.mubr.bf16.gmra.mrb[0].mxu0 %v983
      %v1091 = vpop.f32.mrb[0].mxu0
      %v1092 = vadd.f32 0.0, %v1091
      %v1093 = vpop.f32.mrb[0].mxu0
      %v1094 = vpop.f32.mrb[0].mxu0
      %v1095 = vadd.f32 0.0, %v1094
      %v1096 = vpop.f32.mrb[0].mxu0
      %1097 = vmatprep.mubr.bf16.mxu0 0
      %1098 = vmatmul.mubr.bf16.gmra.mrb[0].mxu0 %v985
      %v1099 = vpop.f32.mrb[0].mxu0
      %v1100 = vadd.f32 0.0, %v1099
      %v1101 = vpop.f32.mrb[0].mxu0
      %v1102 = vpop.f32.mrb[0].mxu0
      %v1103 = vadd.f32 0.0, %v1102
      %v1104 = vpop.f32.mrb[0].mxu0
      %1105 = vmatprep.mubr.bf16.mxu0 0
      %1106 = vmatmul.mubr.bf16.gmra.mrb[0].mxu0 %v987
      %v1107 = vpop.f32.mrb[0].mxu0
      %v1108 = vadd.f32 0.0, %v1107
      %v1109 = vpop.f32.mrb[0].mxu0
      %v1110 = vpop.f32.mrb[0].mxu0
      %v1111 = vadd.f32 0.0, %v1110
      %v1112 = vpop.f32.mrb[0].mxu0
      %1113 = vmatprep.mubr.bf16.mxu0 0
      %1114 = vmatmul.mubr.bf16.gmra.mrb[0].mxu0 %v989
      %v1115 = vpop.f32.mrb[0].mxu0
      %v1116 = vadd.f32 0.0, %v1115
      %v1117 = vpop.f32.mrb[0].mxu0
      %v1118 = vpop.f32.mrb[0].mxu0
      %v1119 = vadd.f32 0.0, %v1118
      %v1120 = vpop.f32.mrb[0].mxu0
      %1121 = vmatprep.mubr.bf16.mxu0 0
      %1122 = vmatmul.mubr.bf16.gmra.mrb[0].mxu0 %v991
      %v1123 = vpop.f32.mrb[0].mxu0
      %v1124 = vadd.f32 0.0, %v1123
      %v1125 = vpop.f32.mrb[0].mxu0
      %v1126 = vpop.f32.mrb[0].mxu0
      %v1127 = vadd.f32 0.0, %v1126
      %v1128 = vpop.f32.mrb[0].mxu0
      %1129 = vmatprep.mubr.bf16.mxu0 0
      %1130 = vmatmul.mubr.bf16.gmra.mrb[0].mxu0 %v993
      %v1131 = vpop.f32.mrb[0].mxu0
      %v1132 = vadd.f32 0.0, %v1131
      %v1133 = vpop.f32.mrb[0].mxu0
      %v1134 = vpop.f32.mrb[0].mxu0
      %v1135 = vadd.f32 0.0, %v1134
      %v1136 = vpop.f32.mrb[0].mxu0
      %1137 = vmatprep.mubr.bf16.mxu0 0
      %1138 = vmatmul.mubr.bf16.gmra.mrb[0].mxu0 %v995
      %v1139 = vpop.f32.mrb[0].mxu0
      %v1140 = vadd.f32 0.0, %v1139
      %v1141 = vpop.f32.mrb[0].mxu0
      %v1142 = vpop.f32.mrb[0].mxu0
      %v1143 = vadd.f32 0.0, %v1142
      %v1144 = vpop.f32.mrb[0].mxu0
      %1145 = vmatprep.mubr.bf16.mxu0 0
      %1146 = vmatmul.mubr.bf16.gmra.mrb[0].mxu0 %v997
      %v1147 = vpop.f32.mrb[0].mxu0
      %v1148 = vadd.f32 0.0, %v1147
      %v1149 = vpop.f32.mrb[0].mxu0
      %v1150 = vpop.f32.mrb[0].mxu0
      %v1151 = vadd.f32 0.0, %v1150
      %v1152 = vpop.f32.mrb[0].mxu0
      %1153 = vmatprep.mubr.bf16.mxu0 0
      %1154 = vmatmul.mubr.bf16.gmra.mrb[0].mxu0 %v999
      %v1155 = vpop.f32.mrb[0].mxu0
      %v1156 = vadd.f32 0.0, %v1155
      %v1157 = vpop.f32.mrb[0].mxu0
      %v1158 = vpop.f32.mrb[0].mxu0
      %v1159 = vadd.f32 0.0, %v1158
      %v1160 = vpop.f32.mrb[0].mxu0
      %1161 = vdwg.mxu0
      %vm1194 = vcmask 1040384
      %v1195 = vrot.slane %v1036, 7
      %v1196 = vrot.slane %v1039, 7
      %v1197 = vsel %vm1194, %v1195, %v1196
      %v1198 = vrot.slane %v1044, 7
      %v1199 = vsel %vm1194, %v1196, %v1198
      %v1200 = vrot.slane %v1047, 7
      %v1201 = vsel %vm1194, %v1198, %v1200
      %v1202 = vrot.slane %v1052, 7
      %v1203 = vsel %vm1194, %v1200, %v1202
      %v1204 = vrot.slane %v1055, 7
      %v1205 = vsel %vm1194, %v1202, %v1204
      %v1206 = vrot.slane %v1060, 7
      %v1207 = vsel %vm1194, %v1204, %v1206
      %v1208 = vrot.slane %v1063, 7
      %v1209 = vsel %vm1194, %v1206, %v1208
      %v1210 = vrot.slane %v1068, 7
      %v1211 = vsel %vm1194, %v1208, %v1210
      %v1212 = vrot.slane %v1071, 7
      %v1213 = vsel %vm1194, %v1210, %v1212
      %v1214 = vrot.slane %v1076, 7
      %v1215 = vsel %vm1194, %v1212, %v1214
      %v1216 = vrot.slane %v1079, 7
      %v1217 = vsel %vm1194, %v1214, %v1216
      %v1218 = vrot.slane %v1084, 7
      %v1219 = vsel %vm1194, %v1216, %v1218
      %v1220 = vrot.slane %v1087, 7
      %v1221 = vsel %vm1194, %v1218, %v1220
      %v1222 = vrot.slane %v1092, 7
      %v1223 = vsel %vm1194, %v1220, %v1222
      %v1224 = vrot.slane %v1095, 7
      %v1225 = vsel %vm1194, %v1222, %v1224
      %v1226 = vrot.slane %v1100, 7
      %v1227 = vsel %vm1194, %v1224, %v1226
      %v1228 = vrot.slane %v1103, 7
      %v1229 = vsel %vm1194, %v1226, %v1228
      %v1230 = vrot.slane %v1108, 7
      %v1231 = vsel %vm1194, %v1228, %v1230
      %v1232 = vrot.slane %v1111, 7
      %v1233 = vsel %vm1194, %v1230, %v1232
      %v1234 = vrot.slane %v1116, 7
      %v1235 = vsel %vm1194, %v1232, %v1234
      %v1236 = vrot.slane %v1119, 7
      %v1237 = vsel %vm1194, %v1234, %v1236
      %v1238 = vrot.slane %v1124, 7
      %v1239 = vsel %vm1194, %v1236, %v1238
      %v1240 = vrot.slane %v1127, 7
      %v1241 = vsel %vm1194, %v1238, %v1240
      %v1242 = vrot.slane %v1132, 7
      %v1243 = vsel %vm1194, %v1240, %v1242
      %v1244 = vrot.slane %v1135, 7
      %v1245 = vsel %vm1194, %v1242, %v1244
      %v1246 = vrot.slane %v1140, 7
      %v1247 = vsel %vm1194, %v1244, %v1246
      %v1248 = vrot.slane %v1143, 7
      %v1249 = vsel %vm1194, %v1246, %v1248
      %v1250 = vrot.slane %v1148, 7
      %v1251 = vsel %vm1194, %v1248, %v1250
      %v1252 = vrot.slane %v1151, 7
      %v1253 = vsel %vm1194, %v1250, %v1252
      %v1254 = vrot.slane %v1156, 7
      %v1255 = vsel %vm1194, %v1252, %v1254
      %v1256 = vrot.slane %v1159, 7
      %v1257 = vsel %vm1194, %v1254, %v1256
      %v1290 = vsel %vm1194, 0.0, %v1195
      %v1291 = vsel %vm691, 1, 0
      %v1292 = vsel %vm692, 1, 0
      %v1293 = vsel %vm693, 1, 0
      %v1294 = vsel %vm694, 1, 0
      %v1295 = vsel %vm695, 1, 0
      %v1296 = vsel %vm696, 1, 0
      %v1297 = vsel %vm697, 1, 0
      %v1298 = vsel %vm698, 1, 0
      %v1299 = vsel %vm699, 1, 0
      %v1300 = vsel %vm700, 1, 0
      %v1301 = vsel %vm701, 1, 0
      %v1302 = vsel %vm702, 1, 0
      %v1303 = vsel %vm703, 1, 0
      %v1304 = vsel %vm704, 1, 0
      %v1305 = vsel %vm705, 1, 0
      %v1306 = vsel %vm706, 1, 0
      %v1307 = vsel %vm707, 1, 0
      %v1308 = vsel %vm708, 1, 0
      %v1309 = vsel %vm709, 1, 0
      %v1310 = vsel %vm710, 1, 0
      %v1311 = vsel %vm711, 1, 0
      %v1312 = vsel %vm712, 1, 0
      %v1313 = vsel %vm713, 1, 0
      %v1314 = vsel %vm714, 1, 0
      %v1315 = vsel %vm715, 1, 0
      %v1316 = vsel %vm716, 1, 0
      %v1317 = vsel %vm717, 1, 0
      %v1318 = vsel %vm718, 1, 0
      %v1319 = vsel %vm719, 1, 0
      %v1320 = vsel %vm720, 1, 0
      %v1321 = vsel %vm721, 1, 0
      %v1322 = vsel %vm722, 1, 0
      %vm1323 = vcmp.eq.s32.totalorder %v1291, 1
      %vm1324 = vcmp.eq.s32.totalorder %v1292, 1
      %vm1325 = vcmp.eq.s32.totalorder %v1293, 1
      %vm1326 = vcmp.eq.s32.totalorder %v1294, 1
      %vm1327 = vcmp.eq.s32.totalorder %v1295, 1
      %vm1328 = vcmp.eq.s32.totalorder %v1296, 1
      %vm1329 = vcmp.eq.s32.totalorder %v1297, 1
      %vm1330 = vcmp.eq.s32.totalorder %v1298, 1
      %vm1331 = vcmp.eq.s32.totalorder %v1299, 1
      %vm1332 = vcmp.eq.s32.totalorder %v1300, 1
      %vm1333 = vcmp.eq.s32.totalorder %v1301, 1
      %vm1334 = vcmp.eq.s32.totalorder %v1302, 1
      %vm1335 = vcmp.eq.s32.totalorder %v1303, 1
      %vm1336 = vcmp.eq.s32.totalorder %v1304, 1
      %vm1337 = vcmp.eq.s32.totalorder %v1305, 1
      %vm1338 = vcmp.eq.s32.totalorder %v1306, 1
      %vm1339 = vcmp.eq.s32.totalorder %v1307, 1
      %vm1340 = vcmp.eq.s32.totalorder %v1308, 1
      %vm1341 = vcmp.eq.s32.totalorder %v1309, 1
      %vm1342 = vcmp.eq.s32.totalorder %v1310, 1
      %vm1343 = vcmp.eq.s32.totalorder %v1311, 1
      %vm1344 = vcmp.eq.s32.totalorder %v1312, 1
      %vm1345 = vcmp.eq.s32.totalorder %v1313, 1
      %vm1346 = vcmp.eq.s32.totalorder %v1314, 1
      %vm1347 = vcmp.eq.s32.totalorder %v1315, 1
      %vm1348 = vcmp.eq.s32.totalorder %v1316, 1
      %vm1349 = vcmp.eq.s32.totalorder %v1317, 1
      %vm1350 = vcmp.eq.s32.totalorder %v1318, 1
      %vm1351 = vcmp.eq.s32.totalorder %v1319, 1
      %vm1352 = vcmp.eq.s32.totalorder %v1320, 1
      %vm1353 = vcmp.eq.s32.totalorder %v1321, 1
      %vm1354 = vcmp.eq.s32.totalorder %v1322, 1
      %v1355 = vsel %vm1323, %v1290, 0.0
      %v1356 = vsel %vm1324, %v1197, 0.0
      %v1357 = vsel %vm1325, %v1199, 0.0
      %v1358 = vsel %vm1326, %v1201, 0.0
      %v1359 = vsel %vm1327, %v1203, 0.0
      %v1360 = vsel %vm1328, %v1205, 0.0
      %v1361 = vsel %vm1329, %v1207, 0.0
      %v1362 = vsel %vm1330, %v1209, 0.0
      %v1363 = vsel %vm1331, %v1211, 0.0
      %v1364 = vsel %vm1332, %v1213, 0.0
      %v1365 = vsel %vm1333, %v1215, 0.0
      %v1366 = vsel %vm1334, %v1217, 0.0
      %v1367 = vsel %vm1335, %v1219, 0.0
      %v1368 = vsel %vm1336, %v1221, 0.0
      %v1369 = vsel %vm1337, %v1223, 0.0
      %v1370 = vsel %vm1338, %v1225, 0.0
      %v1371 = vsel %vm1339, %v1227, 0.0
      %v1372 = vsel %vm1340, %v1229, 0.0
      %v1373 = vsel %vm1341, %v1231, 0.0
      %v1374 = vsel %vm1342, %v1233, 0.0
      %v1375 = vsel %vm1343, %v1235, 0.0
      %v1376 = vsel %vm1344, %v1237, 0.0
      %v1377 = vsel %vm1345, %v1239, 0.0
      %v1378 = vsel %vm1346, %v1241, 0.0
      %v1379 = vsel %vm1347, %v1243, 0.0
      %v1380 = vsel %vm1348, %v1245, 0.0
      %v1381 = vsel %vm1349, %v1247, 0.0
      %v1382 = vsel %vm1350, %v1249, 0.0
      %v1383 = vsel %vm1351, %v1251, 0.0
      %v1384 = vsel %vm1352, %v1253, 0.0
      %v1385 = vsel %vm1353, %v1255, 0.0
      %v1386 = vsel %vm1354, %v1257, 0.0
      %vm1387 = vcmask 1046528
      %v1388 = vrot.slane %v1036, 1
      %v1389 = vrot.slane %v1039, 1
      %v1390 = vsel %vm1387, %v1388, %v1389
      %v1391 = vrot.slane %v1044, 1
      %v1392 = vsel %vm1387, %v1389, %v1391
      %v1393 = vrot.slane %v1047, 1
      %v1394 = vsel %vm1387, %v1391, %v1393
      %v1395 = vrot.slane %v1052, 1
      %v1396 = vsel %vm1387, %v1393, %v1395
      %v1397 = vrot.slane %v1055, 1
      %v1398 = vsel %vm1387, %v1395, %v1397
      %v1399 = vrot.slane %v1060, 1
      %v1400 = vsel %vm1387, %v1397, %v1399
      %v1401 = vrot.slane %v1063, 1
      %v1402 = vsel %vm1387, %v1399, %v1401
      %v1403 = vrot.slane %v1068, 1
      %v1404 = vsel %vm1387, %v1401, %v1403
      %v1405 = vrot.slane %v1071, 1
      %v1406 = vsel %vm1387, %v1403, %v1405
      %v1407 = vrot.slane %v1076, 1
      %v1408 = vsel %vm1387, %v1405, %v1407
      %v1409 = vrot.slane %v1079, 1
      %v1410 = vsel %vm1387, %v1407, %v1409
      %v1411 = vrot.slane %v1084, 1
      %v1412 = vsel %vm1387, %v1409, %v1411
      %v1413 = vrot.slane %v1087, 1
      %v1414 = vsel %vm1387, %v1411, %v1413
      %v1415 = vrot.slane %v1092, 1
      %v1416 = vsel %vm1387, %v1413, %v1415
      %v1417 = vrot.slane %v1095, 1
      %v1418 = vsel %vm1387, %v1415, %v1417
      %v1419 = vrot.slane %v1100, 1
      %v1420 = vsel %vm1387, %v1417, %v1419
      %v1421 = vrot.slane %v1103, 1
      %v1422 = vsel %vm1387, %v1419, %v1421
      %v1423 = vrot.slane %v1108, 1
      %v1424 = vsel %vm1387, %v1421, %v1423
      %v1425 = vrot.slane %v1111, 1
      %v1426 = vsel %vm1387, %v1423, %v1425
      %v1427 = vrot.slane %v1116, 1
      %v1428 = vsel %vm1387, %v1425, %v1427
      %v1429 = vrot.slane %v1119, 1
      %v1430 = vsel %vm1387, %v1427, %v1429
      %v1431 = vrot.slane %v1124, 1
      %v1432 = vsel %vm1387, %v1429, %v1431
      %v1433 = vrot.slane %v1127, 1
      %v1434 = vsel %vm1387, %v1431, %v1433
      %v1435 = vrot.slane %v1132, 1
      %v1436 = vsel %vm1387, %v1433, %v1435
      %v1437 = vrot.slane %v1135, 1
      %v1438 = vsel %vm1387, %v1435, %v1437
      %v1439 = vrot.slane %v1140, 1
      %v1440 = vsel %vm1387, %v1437, %v1439
      %v1441 = vrot.slane %v1143, 1
      %v1442 = vsel %vm1387, %v1439, %v1441
      %v1443 = vrot.slane %v1148, 1
      %v1444 = vsel %vm1387, %v1441, %v1443
      %v1445 = vrot.slane %v1151, 1
      %v1446 = vsel %vm1387, %v1443, %v1445
      %v1447 = vrot.slane %v1156, 1
      %v1448 = vsel %vm1387, %v1445, %v1447
      %v1449 = vrot.slane %v1159, 1
      %v1450 = vsel %vm1387, %v1447, %v1449
      %v1483 = vsel %vm1387, %v1449, 0.0
      %v1484 = vsel %vm723, 1, 0
      %v1485 = vsel %vm724, 1, 0
      %v1486 = vsel %vm725, 1, 0
      %v1487 = vsel %vm726, 1, 0
      %v1488 = vsel %vm727, 1, 0
      %v1489 = vsel %vm728, 1, 0
      %v1490 = vsel %vm729, 1, 0
      %v1491 = vsel %vm730, 1, 0
      %v1492 = vsel %vm731, 1, 0
      %v1493 = vsel %vm732, 1, 0
      %v1494 = vsel %vm733, 1, 0
      %v1495 = vsel %vm734, 1, 0
      %v1496 = vsel %vm735, 1, 0
      %v1497 = vsel %vm736, 1, 0
      %v1498 = vsel %vm737, 1, 0
      %v1499 = vsel %vm738, 1, 0
      %v1500 = vsel %vm739, 1, 0
      %v1501 = vsel %vm740, 1, 0
      %v1502 = vsel %vm741, 1, 0
      %v1503 = vsel %vm742, 1, 0
      %v1504 = vsel %vm743, 1, 0
      %v1505 = vsel %vm744, 1, 0
      %v1506 = vsel %vm745, 1, 0
      %v1507 = vsel %vm746, 1, 0
      %v1508 = vsel %vm747, 1, 0
      %v1509 = vsel %vm748, 1, 0
      %v1510 = vsel %vm749, 1, 0
      %v1511 = vsel %vm750, 1, 0
      %v1512 = vsel %vm751, 1, 0
      %v1513 = vsel %vm752, 1, 0
      %v1514 = vsel %vm753, 1, 0
      %v1515 = vsel %vm754, 1, 0
      %vm1516 = vcmp.eq.s32.totalorder %v1484, 1
      %vm1517 = vcmp.eq.s32.totalorder %v1485, 1
      %vm1518 = vcmp.eq.s32.totalorder %v1486, 1
      %vm1519 = vcmp.eq.s32.totalorder %v1487, 1
      %vm1520 = vcmp.eq.s32.totalorder %v1488, 1
      %vm1521 = vcmp.eq.s32.totalorder %v1489, 1
      %vm1522 = vcmp.eq.s32.totalorder %v1490, 1
      %vm1523 = vcmp.eq.s32.totalorder %v1491, 1
      %vm1524 = vcmp.eq.s32.totalorder %v1492, 1
      %vm1525 = vcmp.eq.s32.totalorder %v1493, 1
      %vm1526 = vcmp.eq.s32.totalorder %v1494, 1
      %vm1527 = vcmp.eq.s32.totalorder %v1495, 1
      %vm1528 = vcmp.eq.s32.totalorder %v1496, 1
      %vm1529 = vcmp.eq.s32.totalorder %v1497, 1
      %vm1530 = vcmp.eq.s32.totalorder %v1498, 1
      %vm1531 = vcmp.eq.s32.totalorder %v1499, 1
      %vm1532 = vcmp.eq.s32.totalorder %v1500, 1
      %vm1533 = vcmp.eq.s32.totalorder %v1501, 1
      %vm1534 = vcmp.eq.s32.totalorder %v1502, 1
      %vm1535 = vcmp.eq.s32.totalorder %v1503, 1
      %vm1536 = vcmp.eq.s32.totalorder %v1504, 1
      %vm1537 = vcmp.eq.s32.totalorder %v1505, 1
      %vm1538 = vcmp.eq.s32.totalorder %v1506, 1
      %vm1539 = vcmp.eq.s32.totalorder %v1507, 1
      %vm1540 = vcmp.eq.s32.totalorder %v1508, 1
      %vm1541 = vcmp.eq.s32.totalorder %v1509, 1
      %vm1542 = vcmp.eq.s32.totalorder %v1510, 1
      %vm1543 = vcmp.eq.s32.totalorder %v1511, 1
      %vm1544 = vcmp.eq.s32.totalorder %v1512, 1
      %vm1545 = vcmp.eq.s32.totalorder %v1513, 1
      %vm1546 = vcmp.eq.s32.totalorder %v1514, 1
      %vm1547 = vcmp.eq.s32.totalorder %v1515, 1
      %v1548 = vsel %vm1516, %v1390, 0.0
      %v1549 = vsel %vm1517, %v1392, 0.0
      %v1550 = vsel %vm1518, %v1394, 0.0
      %v1551 = vsel %vm1519, %v1396, 0.0
      %v1552 = vsel %vm1520, %v1398, 0.0
      %v1553 = vsel %vm1521, %v1400, 0.0
      %v1554 = vsel %vm1522, %v1402, 0.0
      %v1555 = vsel %vm1523, %v1404, 0.0
      %v1556 = vsel %vm1524, %v1406, 0.0
      %v1557 = vsel %vm1525, %v1408, 0.0
      %v1558 = vsel %vm1526, %v1410, 0.0
      %v1559 = vsel %vm1527, %v1412, 0.0
      %v1560 = vsel %vm1528, %v1414, 0.0
      %v1561 = vsel %vm1529, %v1416, 0.0
      %v1562 = vsel %vm1530, %v1418, 0.0
      %v1563 = vsel %vm1531, %v1420, 0.0
      %v1564 = vsel %vm1532, %v1422, 0.0
      %v1565 = vsel %vm1533, %v1424, 0.0
      %v1566 = vsel %vm1534, %v1426, 0.0
      %v1567 = vsel %vm1535, %v1428, 0.0
      %v1568 = vsel %vm1536, %v1430, 0.0
      %v1569 = vsel %vm1537, %v1432, 0.0
      %v1570 = vsel %vm1538, %v1434, 0.0
      %v1571 = vsel %vm1539, %v1436, 0.0
      %v1572 = vsel %vm1540, %v1438, 0.0
      %v1573 = vsel %vm1541, %v1440, 0.0
      %v1574 = vsel %vm1542, %v1442, 0.0
      %v1575 = vsel %vm1543, %v1444, 0.0
      %v1576 = vsel %vm1544, %v1446, 0.0
      %v1577 = vsel %vm1545, %v1448, 0.0
      %v1578 = vsel %vm1546, %v1450, 0.0
      %v1579 = vsel %vm1547, %v1483, 0.0
      %1580 = vrot.lane.b32.xlu0 %v1036, 96
      %v1581 = vpop.permute.xlu0 %1580
      %1582 = vrot.lane.b32.xlu0 %v1039, 96
      %v1583 = vpop.permute.xlu0 %1582
      %1584 = vrot.lane.b32.xlu0 %v1044, 96
      %v1585 = vpop.permute.xlu0 %1584
      %1586 = vrot.lane.b32.xlu0 %v1047, 96
      %v1587 = vpop.permute.xlu0 %1586
      %1588 = vrot.lane.b32.xlu0 %v1052, 96
      %v1589 = vpop.permute.xlu0 %1588
      %1590 = vrot.lane.b32.xlu0 %v1055, 96
      %v1591 = vpop.permute.xlu0 %1590
      %1592 = vrot.lane.b32.xlu0 %v1060, 96
      %v1593 = vpop.permute.xlu0 %1592
      %1594 = vrot.lane.b32.xlu0 %v1063, 96
      %v1595 = vpop.permute.xlu0 %1594
      %1596 = vrot.lane.b32.xlu0 %v1068, 96
      %v1597 = vpop.permute.xlu0 %1596
      %1598 = vrot.lane.b32.xlu0 %v1071, 96
      %v1599 = vpop.permute.xlu0 %1598
      %1600 = vrot.lane.b32.xlu0 %v1076, 96
      %v1601 = vpop.permute.xlu0 %1600
      %1602 = vrot.lane.b32.xlu0 %v1079, 96
      %v1603 = vpop.permute.xlu0 %1602
      %1604 = vrot.lane.b32.xlu0 %v1084, 96
      %v1605 = vpop.permute.xlu0 %1604
      %1606 = vrot.lane.b32.xlu0 %v1087, 96
      %v1607 = vpop.permute.xlu0 %1606
      %1608 = vrot.lane.b32.xlu0 %v1092, 96
      %v1609 = vpop.permute.xlu0 %1608
      %1610 = vrot.lane.b32.xlu0 %v1095, 96
      %v1611 = vpop.permute.xlu0 %1610
      %1612 = vrot.lane.b32.xlu0 %v1100, 96
      %v1613 = vpop.permute.xlu0 %1612
      %1614 = vrot.lane.b32.xlu0 %v1103, 96
      %v1615 = vpop.permute.xlu0 %1614
      %1616 = vrot.lane.b32.xlu0 %v1108, 96
      %v1617 = vpop.permute.xlu0 %1616
      %1618 = vrot.lane.b32.xlu0 %v1111, 96
      %v1619 = vpop.permute.xlu0 %1618
      %1620 = vrot.lane.b32.xlu0 %v1116, 96
      %v1621 = vpop.permute.xlu0 %1620
      %1622 = vrot.lane.b32.xlu0 %v1119, 96
      %v1623 = vpop.permute.xlu0 %1622
      %1624 = vrot.lane.b32.xlu0 %v1124, 96
      %v1625 = vpop.permute.xlu0 %1624
      %1626 = vrot.lane.b32.xlu0 %v1127, 96
      %v1627 = vpop.permute.xlu0 %1626
      %1628 = vrot.lane.b32.xlu0 %v1132, 96
      %v1629 = vpop.permute.xlu0 %1628
      %1630 = vrot.lane.b32.xlu0 %v1135, 96
      %v1631 = vpop.permute.xlu0 %1630
      %1632 = vrot.lane.b32.xlu0 %v1140, 96
      %v1633 = vpop.permute.xlu0 %1632
      %1634 = vrot.lane.b32.xlu0 %v1143, 96
      %v1635 = vpop.permute.xlu0 %1634
      %1636 = vrot.lane.b32.xlu0 %v1148, 96
      %v1637 = vpop.permute.xlu0 %1636
      %1638 = vrot.lane.b32.xlu0 %v1151, 96
      %v1639 = vpop.permute.xlu0 %1638
      %1640 = vrot.lane.b32.xlu0 %v1156, 96
      %v1641 = vpop.permute.xlu0 %1640
      %1642 = vrot.lane.b32.xlu0 %v1159, 96
      %v1643 = vpop.permute.xlu0 %1642
      %v1676 = vadd.f32 %v1355, %v1581
      %v1677 = vadd.f32 %v1356, %v1583
      %v1678 = vadd.f32 %v1357, %v1585
      %v1679 = vadd.f32 %v1358, %v1587
      %v1680 = vadd.f32 %v1359, %v1589
      %v1681 = vadd.f32 %v1360, %v1591
      %v1682 = vadd.f32 %v1361, %v1593
      %v1683 = vadd.f32 %v1362, %v1595
      %v1684 = vadd.f32 %v1363, %v1597
      %v1685 = vadd.f32 %v1364, %v1599
      %v1686 = vadd.f32 %v1365, %v1601
      %v1687 = vadd.f32 %v1366, %v1603
      %v1688 = vadd.f32 %v1367, %v1605
      %v1689 = vadd.f32 %v1368, %v1607
      %v1690 = vadd.f32 %v1369, %v1609
      %v1691 = vadd.f32 %v1370, %v1611
      %v1692 = vadd.f32 %v1371, %v1613
      %v1693 = vadd.f32 %v1372, %v1615
      %v1694 = vadd.f32 %v1373, %v1617
      %v1695 = vadd.f32 %v1374, %v1619
      %v1696 = vadd.f32 %v1375, %v1621
      %v1697 = vadd.f32 %v1376, %v1623
      %v1698 = vadd.f32 %v1377, %v1625
      %v1699 = vadd.f32 %v1378, %v1627
      %v1700 = vadd.f32 %v1379, %v1629
      %v1701 = vadd.f32 %v1380, %v1631
      %v1702 = vadd.f32 %v1381, %v1633
      %v1703 = vadd.f32 %v1382, %v1635
      %v1704 = vadd.f32 %v1383, %v1637
      %v1705 = vadd.f32 %v1384, %v1639
      %v1706 = vadd.f32 %v1385, %v1641
      %v1707 = vadd.f32 %v1386, %v1643
      %1740 = vrot.lane.b32.xlu0 %v1548, 64
      %v1741 = vpop.permute.xlu0 %1740
      %1742 = vrot.lane.b32.xlu0 %v1549, 64
      %v1743 = vpop.permute.xlu0 %1742
      %1744 = vrot.lane.b32.xlu0 %v1550, 64
      %v1745 = vpop.permute.xlu0 %1744
      %1746 = vrot.lane.b32.xlu0 %v1551, 64
      %v1747 = vpop.permute.xlu0 %1746
      %1748 = vrot.lane.b32.xlu0 %v1552, 64
      %v1749 = vpop.permute.xlu0 %1748
      %1750 = vrot.lane.b32.xlu0 %v1553, 64
      %v1751 = vpop.permute.xlu0 %1750
      %1752 = vrot.lane.b32.xlu0 %v1554, 64
      %v1753 = vpop.permute.xlu0 %1752
      %1754 = vrot.lane.b32.xlu0 %v1555, 64
      %v1755 = vpop.permute.xlu0 %1754
      %1756 = vrot.lane.b32.xlu0 %v1556, 64
      %v1757 = vpop.permute.xlu0 %1756
      %1758 = vrot.lane.b32.xlu0 %v1557, 64
      %v1759 = vpop.permute.xlu0 %1758
      %1760 = vrot.lane.b32.xlu0 %v1558, 64
      %v1761 = vpop.permute.xlu0 %1760
      %1762 = vrot.lane.b32.xlu0 %v1559, 64
      %v1763 = vpop.permute.xlu0 %1762
      %1764 = vrot.lane.b32.xlu0 %v1560, 64
      %v1765 = vpop.permute.xlu0 %1764
      %1766 = vrot.lane.b32.xlu0 %v1561, 64
      %v1767 = vpop.permute.xlu0 %1766
      %1768 = vrot.lane.b32.xlu0 %v1562, 64
      %v1769 = vpop.permute.xlu0 %1768
      %1770 = vrot.lane.b32.xlu0 %v1563, 64
      %v1771 = vpop.permute.xlu0 %1770
      %1772 = vrot.lane.b32.xlu0 %v1564, 64
      %v1773 = vpop.permute.xlu0 %1772
      %1774 = vrot.lane.b32.xlu0 %v1565, 64
      %v1775 = vpop.permute.xlu0 %1774
      %1776 = vrot.lane.b32.xlu0 %v1566, 64
      %v1777 = vpop.permute.xlu0 %1776
      %1778 = vrot.lane.b32.xlu0 %v1567, 64
      %v1779 = vpop.permute.xlu0 %1778
      %1780 = vrot.lane.b32.xlu0 %v1568, 64
      %v1781 = vpop.permute.xlu0 %1780
      %1782 = vrot.lane.b32.xlu0 %v1569, 64
      %v1783 = vpop.permute.xlu0 %1782
      %1784 = vrot.lane.b32.xlu0 %v1570, 64
      %v1785 = vpop.permute.xlu0 %1784
      %1786 = vrot.lane.b32.xlu0 %v1571, 64
      %v1787 = vpop.permute.xlu0 %1786
      %1788 = vrot.lane.b32.xlu0 %v1572, 64
      %v1789 = vpop.permute.xlu0 %1788
      %1790 = vrot.lane.b32.xlu0 %v1573, 64
      %v1791 = vpop.permute.xlu0 %1790
      %1792 = vrot.lane.b32.xlu0 %v1574, 64
      %v1793 = vpop.permute.xlu0 %1792
      %1794 = vrot.lane.b32.xlu0 %v1575, 64
      %v1795 = vpop.permute.xlu0 %1794
      %1796 = vrot.lane.b32.xlu0 %v1576, 64
      %v1797 = vpop.permute.xlu0 %1796
      %1798 = vrot.lane.b32.xlu0 %v1577, 64
      %v1799 = vpop.permute.xlu0 %1798
      %1800 = vrot.lane.b32.xlu0 %v1578, 64
      %v1801 = vpop.permute.xlu0 %1800
      %1802 = vrot.lane.b32.xlu0 %v1579, 64
      %v1803 = vpop.permute.xlu0 %1802
      %v1836 = vadd.f32 %v1676, %v1741
      %v1837 = vadd.f32 %v1677, %v1743
      %v1838 = vadd.f32 %v1678, %v1745
      %v1839 = vadd.f32 %v1679, %v1747
      %v1840 = vadd.f32 %v1680, %v1749
      %v1841 = vadd.f32 %v1681, %v1751
      %v1842 = vadd.f32 %v1682, %v1753
      %v1843 = vadd.f32 %v1683, %v1755
      %v1844 = vadd.f32 %v1684, %v1757
      %v1845 = vadd.f32 %v1685, %v1759
      %v1846 = vadd.f32 %v1686, %v1761
      %v1847 = vadd.f32 %v1687, %v1763
      %v1848 = vadd.f32 %v1688, %v1765
      %v1849 = vadd.f32 %v1689, %v1767
      %v1850 = vadd.f32 %v1690, %v1769
      %v1851 = vadd.f32 %v1691, %v1771
      %v1852 = vadd.f32 %v1692, %v1773
      %v1853 = vadd.f32 %v1693, %v1775
      %v1854 = vadd.f32 %v1694, %v1777
      %v1855 = vadd.f32 %v1695, %v1779
      %v1856 = vadd.f32 %v1696, %v1781
      %v1857 = vadd.f32 %v1697, %v1783
      %v1858 = vadd.f32 %v1698, %v1785
      %v1859 = vadd.f32 %v1699, %v1787
      %v1860 = vadd.f32 %v1700, %v1789
      %v1861 = vadd.f32 %v1701, %v1791
      %v1862 = vadd.f32 %v1702, %v1793
      %v1863 = vadd.f32 %v1703, %v1795
      %v1864 = vadd.f32 %v1704, %v1797
      %v1865 = vadd.f32 %v1705, %v1799
      %v1866 = vadd.f32 %v1706, %v1801
      %v1867 = vadd.f32 %v1707, %v1803
      %v1869 = vlaneseq
      %v1870 = vshrl.u32 %v1869, 7
      %v1871 = vsub.s32 0, %v1870
      %v1872 = vrot.slane %v755, %v1871
      %v1874 = vadd.f32 %v1836, %v1872
      %v1875 = vadd.f32 %v1837, %v1872
      %v1876 = vadd.f32 %v1838, %v1872
      %v1877 = vadd.f32 %v1839, %v1872
      %v1878 = vadd.f32 %v1840, %v1872
      %v1879 = vadd.f32 %v1841, %v1872
      %v1880 = vadd.f32 %v1842, %v1872
      %v1881 = vadd.f32 %v1843, %v1872
      %v1882 = vadd.f32 %v1844, %v1872
      %v1883 = vadd.f32 %v1845, %v1872
      %v1884 = vadd.f32 %v1846, %v1872
      %v1885 = vadd.f32 %v1847, %v1872
      %v1886 = vadd.f32 %v1848, %v1872
      %v1887 = vadd.f32 %v1849, %v1872
      %v1888 = vadd.f32 %v1850, %v1872
      %v1889 = vadd.f32 %v1851, %v1872
      %v1890 = vadd.f32 %v1852, %v1872
      %v1891 = vadd.f32 %v1853, %v1872
      %v1892 = vadd.f32 %v1854, %v1872
      %v1893 = vadd.f32 %v1855, %v1872
      %v1894 = vadd.f32 %v1856, %v1872
      %v1895 = vadd.f32 %v1857, %v1872
      %v1896 = vadd.f32 %v1858, %v1872
      %v1897 = vadd.f32 %v1859, %v1872
      %v1898 = vadd.f32 %v1860, %v1872
      %v1899 = vadd.f32 %v1861, %v1872
      %v1900 = vadd.f32 %v1862, %v1872
      %v1901 = vadd.f32 %v1863, %v1872
      %v1902 = vadd.f32 %v1864, %v1872
      %v1903 = vadd.f32 %v1865, %v1872
      %v1904 = vadd.f32 %v1866, %v1872
      %v1905 = vadd.f32 %v1867, %v1872
      %v1906 = vmax.f32 %v1874, 0.0
      %v1907 = vmax.f32 %v1875, 0.0
      %v1908 = vmax.f32 %v1876, 0.0
      %v1909 = vmax.f32 %v1877, 0.0
      %v1910 = vmax.f32 %v1878, 0.0
      %v1911 = vmax.f32 %v1879, 0.0
      %v1912 = vmax.f32 %v1880, 0.0
      %v1913 = vmax.f32 %v1881, 0.0
      %v1914 = vmax.f32 %v1882, 0.0
      %v1915 = vmax.f32 %v1883, 0.0
      %v1916 = vmax.f32 %v1884, 0.0
      %v1917 = vmax.f32 %v1885, 0.0
      %v1918 = vmax.f32 %v1886, 0.0
      %v1919 = vmax.f32 %v1887, 0.0
      %v1920 = vmax.f32 %v1888, 0.0
      %v1921 = vmax.f32 %v1889, 0.0
      %v1922 = vmax.f32 %v1890, 0.0
      %v1923 = vmax.f32 %v1891, 0.0
      %v1924 = vmax.f32 %v1892, 0.0
      %v1925 = vmax.f32 %v1893, 0.0
      %v1926 = vmax.f32 %v1894, 0.0
      %v1927 = vmax.f32 %v1895, 0.0
      %v1928 = vmax.f32 %v1896, 0.0
      %v1929 = vmax.f32 %v1897, 0.0
      %v1930 = vmax.f32 %v1898, 0.0
      %v1931 = vmax.f32 %v1899, 0.0
      %v1932 = vmax.f32 %v1900, 0.0
      %v1933 = vmax.f32 %v1901, 0.0
      %v1934 = vmax.f32 %v1902, 0.0
      %v1935 = vmax.f32 %v1903, 0.0
      %v1936 = vmax.f32 %v1904, 0.0
      %v1937 = vmax.f32 %v1905, 0.0
      %v1938 = vpack.c.bf16 %v1907, %v1906
      %v1939 = vpack.c.bf16 %v1909, %v1908
      %v1940 = vpack.c.bf16 %v1911, %v1910
      %v1941 = vpack.c.bf16 %v1913, %v1912
      %v1942 = vpack.c.bf16 %v1915, %v1914
      %v1943 = vpack.c.bf16 %v1917, %v1916
      %v1944 = vpack.c.bf16 %v1919, %v1918
      %v1945 = vpack.c.bf16 %v1921, %v1920
      %v1946 = vpack.c.bf16 %v1923, %v1922
      %v1947 = vpack.c.bf16 %v1925, %v1924
      %v1948 = vpack.c.bf16 %v1927, %v1926
      %v1949 = vpack.c.bf16 %v1929, %v1928
      %v1950 = vpack.c.bf16 %v1931, %v1930
      %v1951 = vpack.c.bf16 %v1933, %v1932
      %v1952 = vpack.c.bf16 %v1935, %v1934
      %v1953 = vpack.c.bf16 %v1937, %v1936
      %1970 = vrot.lane.b32.xlu0 %v1938, 32
      %v1971 = vpop.permute.xlu0 %1970
      %1972 = vrot.lane.b32.xlu0 %v1939, 32
      %v1973 = vpop.permute.xlu0 %1972
      %1974 = vrot.lane.b32.xlu0 %v1940, 32
      %v1975 = vpop.permute.xlu0 %1974
      %1976 = vrot.lane.b32.xlu0 %v1941, 32
      %v1977 = vpop.permute.xlu0 %1976
      %1978 = vrot.lane.b32.xlu0 %v1942, 32
      %v1979 = vpop.permute.xlu0 %1978
      %1980 = vrot.lane.b32.xlu0 %v1943, 32
      %v1981 = vpop.permute.xlu0 %1980
      %1982 = vrot.lane.b32.xlu0 %v1944, 32
      %v1983 = vpop.permute.xlu0 %1982
      %1984 = vrot.lane.b32.xlu0 %v1945, 32
      %v1985 = vpop.permute.xlu0 %1984
      %1986 = vrot.lane.b32.xlu0 %v1946, 32
      %v1987 = vpop.permute.xlu0 %1986
      %1988 = vrot.lane.b32.xlu0 %v1947, 32
      %v1989 = vpop.permute.xlu0 %1988
      %1990 = vrot.lane.b32.xlu0 %v1948, 32
      %v1991 = vpop.permute.xlu0 %1990
      %1992 = vrot.lane.b32.xlu0 %v1949, 32
      %v1993 = vpop.permute.xlu0 %1992
      %1994 = vrot.lane.b32.xlu0 %v1950, 32
      %v1995 = vpop.permute.xlu0 %1994
      %1996 = vrot.lane.b32.xlu0 %v1951, 32
      %v1997 = vpop.permute.xlu0 %1996
      %1998 = vrot.lane.b32.xlu0 %v1952, 32
      %v1999 = vpop.permute.xlu0 %1998
      %2000 = vrot.lane.b32.xlu0 %v1953, 32
      %v2001 = vpop.permute.xlu0 %2000
      %2002 = vrot.lane.b32.xlu0 %v1939, 64
      %v2003 = vpop.permute.xlu0 %2002
      %2004 = vrot.lane.b32.xlu0 %v1940, 64
      %v2005 = vpop.permute.xlu0 %2004
      %2006 = vrot.lane.b32.xlu0 %v1941, 64
      %v2007 = vpop.permute.xlu0 %2006
      %2008 = vrot.lane.b32.xlu0 %v1942, 64
      %v2009 = vpop.permute.xlu0 %2008
      %2010 = vrot.lane.b32.xlu0 %v1943, 64
      %v2011 = vpop.permute.xlu0 %2010
      %2012 = vrot.lane.b32.xlu0 %v1944, 64
      %v2013 = vpop.permute.xlu0 %2012
      %2014 = vrot.lane.b32.xlu0 %v1945, 64
      %v2015 = vpop.permute.xlu0 %2014
      %2016 = vrot.lane.b32.xlu0 %v1946, 64
      %v2017 = vpop.permute.xlu0 %2016
      %2018 = vrot.lane.b32.xlu0 %v1947, 64
      %v2019 = vpop.permute.xlu0 %2018
      %2020 = vrot.lane.b32.xlu0 %v1948, 64
      %v2021 = vpop.permute.xlu0 %2020
      %2022 = vrot.lane.b32.xlu0 %v1949, 64
      %v2023 = vpop.permute.xlu0 %2022
      %2024 = vrot.lane.b32.xlu0 %v1950, 64
      %v2025 = vpop.permute.xlu0 %2024
      %2026 = vrot.lane.b32.xlu0 %v1951, 64
      %v2027 = vpop.permute.xlu0 %2026
      %2028 = vrot.lane.b32.xlu0 %v1952, 64
      %v2029 = vpop.permute.xlu0 %2028
      %2030 = vrot.lane.b32.xlu0 %v1953, 64
      %v2031 = vpop.permute.xlu0 %2030
      %v2033 = vsel %vm838, 0, %v1971
      %v2036 = vsel %vm838, %v1938, %v1973
      %v2039 = vsel %vm838, %v1939, %v1975
      %v2042 = vsel %vm838, %v1940, %v1977
      %v2045 = vsel %vm838, %v1941, %v1979
      %v2048 = vsel %vm838, %v1942, %v1981
      %v2051 = vsel %vm838, %v1943, %v1983
      %v2054 = vsel %vm838, %v1944, %v1985
      %v2057 = vsel %vm838, %v1945, %v1987
      %v2060 = vsel %vm838, %v1946, %v1989
      %v2063 = vsel %vm838, %v1947, %v1991
      %v2066 = vsel %vm838, %v1948, %v1993
      %v2069 = vsel %vm838, %v1949, %v1995
      %v2072 = vsel %vm838, %v1950, %v1997
      %v2075 = vsel %vm838, %v1951, %v1999
      %v2078 = vsel %vm838, %v1952, %v2001
      %v2080 = vsel %vm887, %v2033, %v2003
      %v2082 = vsel %vm887, %v2036, %v2005
      %v2084 = vsel %vm887, %v2039, %v2007
      %v2086 = vsel %vm887, %v2042, %v2009
      %v2088 = vsel %vm887, %v2045, %v2011
      %v2090 = vsel %vm887, %v2048, %v2013
      %v2092 = vsel %vm887, %v2051, %v2015
      %v2094 = vsel %vm887, %v2054, %v2017
      %v2096 = vsel %vm887, %v2057, %v2019
      %v2098 = vsel %vm887, %v2060, %v2021
      %v2100 = vsel %vm887, %v2063, %v2023
      %v2102 = vsel %vm887, %v2066, %v2025
      %v2104 = vsel %vm887, %v2069, %v2027
      %v2106 = vsel %vm887, %v2072, %v2029
      %v2108 = vsel %vm887, %v2075, %v2031
      %v2109 = vsel %vm887, %v2078, %v837
      %v2110 = vld [vmem:[%s3] sm:$0xf]
      %v2111 = vld [vmem:[%s3 + $0x4] sm:$0xf]
      %v2112 = vld [vmem:[%s3 + $0x8] sm:$0xf]
      %v2113 = vld [vmem:[%s3 + $0xc] sm:$0xf]
      %v2114 = vld [vmem:[%s3 + $0x10] sm:$0xf]
      %v2115 = vld [vmem:[%s3 + $0x14] sm:$0xf]
      %v2116 = vld [vmem:[%s3 + $0x18] sm:$0xf]
      %v2117 = vld [vmem:[%s3 + $0x1c] sm:$0xf]
      %v2118 = vld [vmem:[%s3 + $0x20] sm:$0xf]
      %v2119 = vld [vmem:[%s3 + $0x24] sm:$0xf]
      %v2120 = vld [vmem:[%s3 + $0x28] sm:$0xf]
      %v2121 = vld [vmem:[%s3 + $0x2c] sm:$0xf]
      %v2134 = vunpack.c.l.b16 %v2110
      %v2135 = vunpack.c.l.b16 %v2111
      %v2136 = vunpack.c.l.b16 %v2112
      %v2137 = vunpack.c.l.b16 %v2113
      %v2138 = vunpack.c.l.b16 %v2114
      %v2139 = vunpack.c.l.b16 %v2115
      %v2140 = vunpack.c.l.b16 %v2116
      %v2141 = vunpack.c.l.b16 %v2117
      %v2142 = vunpack.c.l.b16 %v2118
      %v2143 = vunpack.c.l.b16 %v2119
      %v2144 = vunpack.c.l.b16 %v2120
      %v2145 = vunpack.c.l.b16 %v2121
      %v2146 = vpack.c.b16 %v2135, %v2134
      %v2147 = vpack.c.b16 %v2137, %v2136
      %v2148 = vpack.c.b16 %v2139, %v2138
      %v2149 = vpack.c.b16 %v2141, %v2140
      %v2150 = vpack.c.b16 %v2143, %v2142
      %v2151 = vpack.c.b16 %v2145, %v2144
      %v2158 = vsel %vm968, %v2080, 0
      %v2160 = vsel %vm968, %v2082, 0
      %v2162 = vsel %vm968, %v2084, 0
      %v2164 = vsel %vm968, %v2086, 0
      %v2166 = vsel %vm968, %v2088, 0
      %v2168 = vsel %vm968, %v2090, 0
      %v2170 = vsel %vm968, %v2092, 0
      %v2172 = vsel %vm968, %v2094, 0
      %v2174 = vsel %vm968, %v2096, 0
      %v2176 = vsel %vm968, %v2098, 0
      %v2178 = vsel %vm968, %v2100, 0
      %v2180 = vsel %vm968, %v2102, 0
      %v2182 = vsel %vm968, %v2104, 0
      %v2184 = vsel %vm968, %v2106, 0
      %v2186 = vsel %vm968, %v2108, 0
      %v2188 = vsel %vm968, %v2109, 0
      %2190 = vmatprep.subr.bf16.mxu0 0
      %2191 = vmatpush1.bf16.msra.mxu0 %v2146
      %2192 = vmatprep.subr.bf16.mxu0 0
      %2193 = vmatpush1.bf16.msra.mxu0 %v2147
      %2194 = vmatprep.subr.bf16.mxu0 0
      %2195 = vmatpush1.bf16.msra.mxu0 %v2148
      %2196 = vmatprep.subr.bf16.mxu0 0
      %2197 = vmatpush1.bf16.msra.mxu0 %v2149
      %2198 = vmatprep.subr.bf16.mxu0 0
      %2199 = vmatpush1.bf16.msra.mxu0 %v2150
      %2200 = vmatprep.subr.bf16.mxu0 0
      %2201 = vmatpush1.bf16.msra.mxu0 %v2151
      %2202 = vmatprep.subr.bf16.mxu0 0
      %2203 = vmatpush1.bf16.msra.mxu0 0
      %2204 = vmatprep.subr.bf16.mxu0 0
      %2205 = vmatpush1.bf16.msra.mxu0 0
      %2206 = vmatprep.subr.bf16.mxu0 0
      %2207 = vmatpush1.bf16.msra.mxu0 0
      %2208 = vmatprep.subr.bf16.mxu0 0
      %2209 = vmatpush1.bf16.msra.mxu0 0
      %2210 = vmatprep.subr.bf16.mxu0 0
      %2211 = vmatpush1.bf16.msra.mxu0 0
      %2212 = vmatprep.subr.bf16.mxu0 0
      %2213 = vmatpush1.bf16.msra.mxu0 0
      %2214 = vmatprep.subr.bf16.mxu0 0
      %2215 = vmatpush1.bf16.msra.mxu0 0
      %2216 = vmatprep.subr.bf16.mxu0 0
      %2217 = vmatpush1.bf16.msra.mxu0 0
      %2218 = vmatprep.subr.bf16.mxu0 0
      %2219 = vmatpush1.bf16.msra.mxu0 0
      %2220 = vmatprep.subr.bf16.mxu0 0
      %2221 = vmatpush1.bf16.msra.mxu0 0
      %2222 = vmatprep.mubr.bf16.mxu0 0
      %2223 = vmatmul.mubr.bf16.gmra.mrb[0].mxu0 %v2158
      %v2224 = vpop.f32.mrb[0].mxu0
      %v2225 = vadd.f32 0.0, %v2224
      %v2226 = vpop.f32.mrb[0].mxu0
      %v2227 = vpop.f32.mrb[0].mxu0
      %v2228 = vadd.f32 0.0, %v2227
      %v2229 = vpop.f32.mrb[0].mxu0
      %2230 = vmatprep.mubr.bf16.mxu0 0
      %2231 = vmatmul.mubr.bf16.gmra.mrb[0].mxu0 %v2160
      %v2232 = vpop.f32.mrb[0].mxu0
      %v2233 = vadd.f32 0.0, %v2232
      %v2234 = vpop.f32.mrb[0].mxu0
      %v2235 = vpop.f32.mrb[0].mxu0
      %v2236 = vadd.f32 0.0, %v2235
      %v2237 = vpop.f32.mrb[0].mxu0
      %2238 = vmatprep.mubr.bf16.mxu0 0
      %2239 = vmatmul.mubr.bf16.gmra.mrb[0].mxu0 %v2162
      %v2240 = vpop.f32.mrb[0].mxu0
      %v2241 = vadd.f32 0.0, %v2240
      %v2242 = vpop.f32.mrb[0].mxu0
      %v2243 = vpop.f32.mrb[0].mxu0
      %v2244 = vadd.f32 0.0, %v2243
      %v2245 = vpop.f32.mrb[0].mxu0
      %2246 = vmatprep.mubr.bf16.mxu0 0
      %2247 = vmatmul.mubr.bf16.gmra.mrb[0].mxu0 %v2164
      %v2248 = vpop.f32.mrb[0].mxu0
      %v2249 = vadd.f32 0.0, %v2248
      %v2250 = vpop.f32.mrb[0].mxu0
      %v2251 = vpop.f32.mrb[0].mxu0
      %v2252 = vadd.f32 0.0, %v2251
      %v2253 = vpop.f32.mrb[0].mxu0
      %2254 = vmatprep.mubr.bf16.mxu0 0
      %2255 = vmatmul.mubr.bf16.gmra.mrb[0].mxu0 %v2166
      %v2256 = vpop.f32.mrb[0].mxu0
      %v2257 = vadd.f32 0.0, %v2256
      %v2258 = vpop.f32.mrb[0].mxu0
      %v2259 = vpop.f32.mrb[0].mxu0
      %v2260 = vadd.f32 0.0, %v2259
      %v2261 = vpop.f32.mrb[0].mxu0
      %2262 = vmatprep.mubr.bf16.mxu0 0
      %2263 = vmatmul.mubr.bf16.gmra.mrb[0].mxu0 %v2168
      %v2264 = vpop.f32.mrb[0].mxu0
      %v2265 = vadd.f32 0.0, %v2264
      %v2266 = vpop.f32.mrb[0].mxu0
      %v2267 = vpop.f32.mrb[0].mxu0
      %v2268 = vadd.f32 0.0, %v2267
      %v2269 = vpop.f32.mrb[0].mxu0
      %2270 = vmatprep.mubr.bf16.mxu0 0
      %2271 = vmatmul.mubr.bf16.gmra.mrb[0].mxu0 %v2170
      %v2272 = vpop.f32.mrb[0].mxu0
      %v2273 = vadd.f32 0.0, %v2272
      %v2274 = vpop.f32.mrb[0].mxu0
      %v2275 = vpop.f32.mrb[0].mxu0
      %v2276 = vadd.f32 0.0, %v2275
      %v2277 = vpop.f32.mrb[0].mxu0
      %2278 = vmatprep.mubr.bf16.mxu0 0
      %2279 = vmatmul.mubr.bf16.gmra.mrb[0].mxu0 %v2172
      %v2280 = vpop.f32.mrb[0].mxu0
      %v2281 = vadd.f32 0.0, %v2280
      %v2282 = vpop.f32.mrb[0].mxu0
      %v2283 = vpop.f32.mrb[0].mxu0
      %v2284 = vadd.f32 0.0, %v2283
      %v2285 = vpop.f32.mrb[0].mxu0
      %2286 = vmatprep.mubr.bf16.mxu0 0
      %2287 = vmatmul.mubr.bf16.gmra.mrb[0].mxu0 %v2174
      %v2288 = vpop.f32.mrb[0].mxu0
      %v2289 = vadd.f32 0.0, %v2288
      %v2290 = vpop.f32.mrb[0].mxu0
      %v2291 = vpop.f32.mrb[0].mxu0
      %v2292 = vadd.f32 0.0, %v2291
      %v2293 = vpop.f32.mrb[0].mxu0
      %2294 = vmatprep.mubr.bf16.mxu0 0
      %2295 = vmatmul.mubr.bf16.gmra.mrb[0].mxu0 %v2176
      %v2296 = vpop.f32.mrb[0].mxu0
      %v2297 = vadd.f32 0.0, %v2296
      %v2298 = vpop.f32.mrb[0].mxu0
      %v2299 = vpop.f32.mrb[0].mxu0
      %v2300 = vadd.f32 0.0, %v2299
      %v2301 = vpop.f32.mrb[0].mxu0
      %2302 = vmatprep.mubr.bf16.mxu0 0
      %2303 = vmatmul.mubr.bf16.gmra.mrb[0].mxu0 %v2178
      %v2304 = vpop.f32.mrb[0].mxu0
      %v2305 = vadd.f32 0.0, %v2304
      %v2306 = vpop.f32.mrb[0].mxu0
      %v2307 = vpop.f32.mrb[0].mxu0
      %v2308 = vadd.f32 0.0, %v2307
      %v2309 = vpop.f32.mrb[0].mxu0
      %2310 = vmatprep.mubr.bf16.mxu0 0
      %2311 = vmatmul.mubr.bf16.gmra.mrb[0].mxu0 %v2180
      %v2312 = vpop.f32.mrb[0].mxu0
      %v2313 = vadd.f32 0.0, %v2312
      %v2314 = vpop.f32.mrb[0].mxu0
      %v2315 = vpop.f32.mrb[0].mxu0
      %v2316 = vadd.f32 0.0, %v2315
      %v2317 = vpop.f32.mrb[0].mxu0
      %2318 = vmatprep.mubr.bf16.mxu0 0
      %2319 = vmatmul.mubr.bf16.gmra.mrb[0].mxu0 %v2182
      %v2320 = vpop.f32.mrb[0].mxu0
      %v2321 = vadd.f32 0.0, %v2320
      %v2322 = vpop.f32.mrb[0].mxu0
      %v2323 = vpop.f32.mrb[0].mxu0
      %v2324 = vadd.f32 0.0, %v2323
      %v2325 = vpop.f32.mrb[0].mxu0
      %2326 = vmatprep.mubr.bf16.mxu0 0
      %2327 = vmatmul.mubr.bf16.gmra.mrb[0].mxu0 %v2184
      %v2328 = vpop.f32.mrb[0].mxu0
      %v2329 = vadd.f32 0.0, %v2328
      %v2330 = vpop.f32.mrb[0].mxu0
      %v2331 = vpop.f32.mrb[0].mxu0
      %v2332 = vadd.f32 0.0, %v2331
      %v2333 = vpop.f32.mrb[0].mxu0
      %2334 = vmatprep.mubr.bf16.mxu0 0
      %2335 = vmatmul.mubr.bf16.gmra.mrb[0].mxu0 %v2186
      %v2336 = vpop.f32.mrb[0].mxu0
      %v2337 = vadd.f32 0.0, %v2336
      %v2338 = vpop.f32.mrb[0].mxu0
      %v2339 = vpop.f32.mrb[0].mxu0
      %v2340 = vadd.f32 0.0, %v2339
      %v2341 = vpop.f32.mrb[0].mxu0
      %2342 = vmatprep.mubr.bf16.mxu0 0
      %2343 = vmatmul.mubr.bf16.gmra.mrb[0].mxu0 %v2188
      %v2344 = vpop.f32.mrb[0].mxu0
      %v2345 = vadd.f32 0.0, %v2344
      %v2346 = vpop.f32.mrb[0].mxu0
      %v2347 = vpop.f32.mrb[0].mxu0
      %v2348 = vadd.f32 0.0, %v2347
      %v2349 = vpop.f32.mrb[0].mxu0
      %2350 = vdwg.mxu0
      %v2383 = vrot.slane %v2225, 7
      %v2384 = vrot.slane %v2228, 7
      %v2385 = vsel %vm1194, %v2383, %v2384
      %v2386 = vrot.slane %v2233, 7
      %v2387 = vsel %vm1194, %v2384, %v2386
      %v2388 = vrot.slane %v2236, 7
      %v2389 = vsel %vm1194, %v2386, %v2388
      %v2390 = vrot.slane %v2241, 7
      %v2391 = vsel %vm1194, %v2388, %v2390
      %v2392 = vrot.slane %v2244, 7
      %v2393 = vsel %vm1194, %v2390, %v2392
      %v2394 = vrot.slane %v2249, 7
      %v2395 = vsel %vm1194, %v2392, %v2394
      %v2396 = vrot.slane %v2252, 7
      %v2397 = vsel %vm1194, %v2394, %v2396
      %v2398 = vrot.slane %v2257, 7
      %v2399 = vsel %vm1194, %v2396, %v2398
      %v2400 = vrot.slane %v2260, 7
      %v2401 = vsel %vm1194, %v2398, %v2400
      %v2402 = vrot.slane %v2265, 7
      %v2403 = vsel %vm1194, %v2400, %v2402
      %v2404 = vrot.slane %v2268, 7
      %v2405 = vsel %vm1194, %v2402, %v2404
      %v2406 = vrot.slane %v2273, 7
      %v2407 = vsel %vm1194, %v2404, %v2406
      %v2408 = vrot.slane %v2276, 7
      %v2409 = vsel %vm1194, %v2406, %v2408
      %v2410 = vrot.slane %v2281, 7
      %v2411 = vsel %vm1194, %v2408, %v2410
      %v2412 = vrot.slane %v2284, 7
      %v2413 = vsel %vm1194, %v2410, %v2412
      %v2414 = vrot.slane %v2289, 7
      %v2415 = vsel %vm1194, %v2412, %v2414
      %v2416 = vrot.slane %v2292, 7
      %v2417 = vsel %vm1194, %v2414, %v2416
      %v2418 = vrot.slane %v2297, 7
      %v2419 = vsel %vm1194, %v2416, %v2418
      %v2420 = vrot.slane %v2300, 7
      %v2421 = vsel %vm1194, %v2418, %v2420
      %v2422 = vrot.slane %v2305, 7
      %v2423 = vsel %vm1194, %v2420, %v2422
      %v2424 = vrot.slane %v2308, 7
      %v2425 = vsel %vm1194, %v2422, %v2424
      %v2426 = vrot.slane %v2313, 7
      %v2427 = vsel %vm1194, %v2424, %v2426
      %v2428 = vrot.slane %v2316, 7
      %v2429 = vsel %vm1194, %v2426, %v2428
      %v2430 = vrot.slane %v2321, 7
      %v2431 = vsel %vm1194, %v2428, %v2430
      %v2432 = vrot.slane %v2324, 7
      %v2433 = vsel %vm1194, %v2430, %v2432
      %v2434 = vrot.slane %v2329, 7
      %v2435 = vsel %vm1194, %v2432, %v2434
      %v2436 = vrot.slane %v2332, 7
      %v2437 = vsel %vm1194, %v2434, %v2436
      %v2438 = vrot.slane %v2337, 7
      %v2439 = vsel %vm1194, %v2436, %v2438
      %v2440 = vrot.slane %v2340, 7
      %v2441 = vsel %vm1194, %v2438, %v2440
      %v2442 = vrot.slane %v2345, 7
      %v2443 = vsel %vm1194, %v2440, %v2442
      %v2444 = vrot.slane %v2348, 7
      %v2445 = vsel %vm1194, %v2442, %v2444
      %v2478 = vsel %vm1194, 0.0, %v2383
      %v2479 = vsel %vm1323, %v2478, 0.0
      %v2480 = vsel %vm1324, %v2385, 0.0
      %v2481 = vsel %vm1325, %v2387, 0.0
      %v2482 = vsel %vm1326, %v2389, 0.0
      %v2483 = vsel %vm1327, %v2391, 0.0
      %v2484 = vsel %vm1328, %v2393, 0.0
      %v2485 = vsel %vm1329, %v2395, 0.0
      %v2486 = vsel %vm1330, %v2397, 0.0
      %v2487 = vsel %vm1331, %v2399, 0.0
      %v2488 = vsel %vm1332, %v2401, 0.0
      %v2489 = vsel %vm1333, %v2403, 0.0
      %v2490 = vsel %vm1334, %v2405, 0.0
      %v2491 = vsel %vm1335, %v2407, 0.0
      %v2492 = vsel %vm1336, %v2409, 0.0
      %v2493 = vsel %vm1337, %v2411, 0.0
      %v2494 = vsel %vm1338, %v2413, 0.0
      %v2495 = vsel %vm1339, %v2415, 0.0
      %v2496 = vsel %vm1340, %v2417, 0.0
      %v2497 = vsel %vm1341, %v2419, 0.0
      %v2498 = vsel %vm1342, %v2421, 0.0
      %v2499 = vsel %vm1343, %v2423, 0.0
      %v2500 = vsel %vm1344, %v2425, 0.0
      %v2501 = vsel %vm1345, %v2427, 0.0
      %v2502 = vsel %vm1346, %v2429, 0.0
      %v2503 = vsel %vm1347, %v2431, 0.0
      %v2504 = vsel %vm1348, %v2433, 0.0
      %v2505 = vsel %vm1349, %v2435, 0.0
      %v2506 = vsel %vm1350, %v2437, 0.0
      %v2507 = vsel %vm1351, %v2439, 0.0
      %v2508 = vsel %vm1352, %v2441, 0.0
      %v2509 = vsel %vm1353, %v2443, 0.0
      %v2510 = vsel %vm1354, %v2445, 0.0
      %v2511 = vrot.slane %v2225, 1
      %v2512 = vrot.slane %v2228, 1
      %v2513 = vsel %vm1387, %v2511, %v2512
      %v2514 = vrot.slane %v2233, 1
      %v2515 = vsel %vm1387, %v2512, %v2514
      %v2516 = vrot.slane %v2236, 1
      %v2517 = vsel %vm1387, %v2514, %v2516
      %v2518 = vrot.slane %v2241, 1
      %v2519 = vsel %vm1387, %v2516, %v2518
      %v2520 = vrot.slane %v2244, 1
      %v2521 = vsel %vm1387, %v2518, %v2520
      %v2522 = vrot.slane %v2249, 1
      %v2523 = vsel %vm1387, %v2520, %v2522
      %v2524 = vrot.slane %v2252, 1
      %v2525 = vsel %vm1387, %v2522, %v2524
      %v2526 = vrot.slane %v2257, 1
      %v2527 = vsel %vm1387, %v2524, %v2526
      %v2528 = vrot.slane %v2260, 1
      %v2529 = vsel %vm1387, %v2526, %v2528
      %v2530 = vrot.slane %v2265, 1
      %v2531 = vsel %vm1387, %v2528, %v2530
      %v2532 = vrot.slane %v2268, 1
      %v2533 = vsel %vm1387, %v2530, %v2532
      %v2534 = vrot.slane %v2273, 1
      %v2535 = vsel %vm1387, %v2532, %v2534
      %v2536 = vrot.slane %v2276, 1
      %v2537 = vsel %vm1387, %v2534, %v2536
      %v2538 = vrot.slane %v2281, 1
      %v2539 = vsel %vm1387, %v2536, %v2538
      %v2540 = vrot.slane %v2284, 1
      %v2541 = vsel %vm1387, %v2538, %v2540
      %v2542 = vrot.slane %v2289, 1
      %v2543 = vsel %vm1387, %v2540, %v2542
      %v2544 = vrot.slane %v2292, 1
      %v2545 = vsel %vm1387, %v2542, %v2544
      %v2546 = vrot.slane %v2297, 1
      %v2547 = vsel %vm1387, %v2544, %v2546
      %v2548 = vrot.slane %v2300, 1
      %v2549 = vsel %vm1387, %v2546, %v2548
      %v2550 = vrot.slane %v2305, 1
      %v2551 = vsel %vm1387, %v2548, %v2550
      %v2552 = vrot.slane %v2308, 1
      %v2553 = vsel %vm1387, %v2550, %v2552
      %v2554 = vrot.slane %v2313, 1
      %v2555 = vsel %vm1387, %v2552, %v2554
      %v2556 = vrot.slane %v2316, 1
      %v2557 = vsel %vm1387, %v2554, %v2556
      %v2558 = vrot.slane %v2321, 1
      %v2559 = vsel %vm1387, %v2556, %v2558
      %v2560 = vrot.slane %v2324, 1
      %v2561 = vsel %vm1387, %v2558, %v2560
      %v2562 = vrot.slane %v2329, 1
      %v2563 = vsel %vm1387, %v2560, %v2562
      %v2564 = vrot.slane %v2332, 1
      %v2565 = vsel %vm1387, %v2562, %v2564
      %v2566 = vrot.slane %v2337, 1
      %v2567 = vsel %vm1387, %v2564, %v2566
      %v2568 = vrot.slane %v2340, 1
      %v2569 = vsel %vm1387, %v2566, %v2568
      %v2570 = vrot.slane %v2345, 1
      %v2571 = vsel %vm1387, %v2568, %v2570
      %v2572 = vrot.slane %v2348, 1
      %v2573 = vsel %vm1387, %v2570, %v2572
      %v2606 = vsel %vm1387, %v2572, 0.0
      %v2607 = vsel %vm1516, %v2513, 0.0
      %v2608 = vsel %vm1517, %v2515, 0.0
      %v2609 = vsel %vm1518, %v2517, 0.0
      %v2610 = vsel %vm1519, %v2519, 0.0
      %v2611 = vsel %vm1520, %v2521, 0.0
      %v2612 = vsel %vm1521, %v2523, 0.0
      %v2613 = vsel %vm1522, %v2525, 0.0
      %v2614 = vsel %vm1523, %v2527, 0.0
      %v2615 = vsel %vm1524, %v2529, 0.0
      %v2616 = vsel %vm1525, %v2531, 0.0
      %v2617 = vsel %vm1526, %v2533, 0.0
      %v2618 = vsel %vm1527, %v2535, 0.0
      %v2619 = vsel %vm1528, %v2537, 0.0
      %v2620 = vsel %vm1529, %v2539, 0.0
      %v2621 = vsel %vm1530, %v2541, 0.0
      %v2622 = vsel %vm1531, %v2543, 0.0
      %v2623 = vsel %vm1532, %v2545, 0.0
      %v2624 = vsel %vm1533, %v2547, 0.0
      %v2625 = vsel %vm1534, %v2549, 0.0
      %v2626 = vsel %vm1535, %v2551, 0.0
      %v2627 = vsel %vm1536, %v2553, 0.0
      %v2628 = vsel %vm1537, %v2555, 0.0
      %v2629 = vsel %vm1538, %v2557, 0.0
      %v2630 = vsel %vm1539, %v2559, 0.0
      %v2631 = vsel %vm1540, %v2561, 0.0
      %v2632 = vsel %vm1541, %v2563, 0.0
      %v2633 = vsel %vm1542, %v2565, 0.0
      %v2634 = vsel %vm1543, %v2567, 0.0
      %v2635 = vsel %vm1544, %v2569, 0.0
      %v2636 = vsel %vm1545, %v2571, 0.0
      %v2637 = vsel %vm1546, %v2573, 0.0
      %v2638 = vsel %vm1547, %v2606, 0.0
      %2639 = vrot.lane.b32.xlu0 %v2225, 96
      %v2640 = vpop.permute.xlu0 %2639
      %2641 = vrot.lane.b32.xlu0 %v2228, 96
      %v2642 = vpop.permute.xlu0 %2641
      %2643 = vrot.lane.b32.xlu0 %v2233, 96
      %v2644 = vpop.permute.xlu0 %2643
      %2645 = vrot.lane.b32.xlu0 %v2236, 96
      %v2646 = vpop.permute.xlu0 %2645
      %2647 = vrot.lane.b32.xlu0 %v2241, 96
      %v2648 = vpop.permute.xlu0 %2647
      %2649 = vrot.lane.b32.xlu0 %v2244, 96
      %v2650 = vpop.permute.xlu0 %2649
      %2651 = vrot.lane.b32.xlu0 %v2249, 96
      %v2652 = vpop.permute.xlu0 %2651
      %2653 = vrot.lane.b32.xlu0 %v2252, 96
      %v2654 = vpop.permute.xlu0 %2653
      %2655 = vrot.lane.b32.xlu0 %v2257, 96
      %v2656 = vpop.permute.xlu0 %2655
      %2657 = vrot.lane.b32.xlu0 %v2260, 96
      %v2658 = vpop.permute.xlu0 %2657
      %2659 = vrot.lane.b32.xlu0 %v2265, 96
      %v2660 = vpop.permute.xlu0 %2659
      %2661 = vrot.lane.b32.xlu0 %v2268, 96
      %v2662 = vpop.permute.xlu0 %2661
      %2663 = vrot.lane.b32.xlu0 %v2273, 96
      %v2664 = vpop.permute.xlu0 %2663
      %2665 = vrot.lane.b32.xlu0 %v2276, 96
      %v2666 = vpop.permute.xlu0 %2665
      %2667 = vrot.lane.b32.xlu0 %v2281, 96
      %v2668 = vpop.permute.xlu0 %2667
      %2669 = vrot.lane.b32.xlu0 %v2284, 96
      %v2670 = vpop.permute.xlu0 %2669
      %2671 = vrot.lane.b32.xlu0 %v2289, 96
      %v2672 = vpop.permute.xlu0 %2671
      %2673 = vrot.lane.b32.xlu0 %v2292, 96
      %v2674 = vpop.permute.xlu0 %2673
      %2675 = vrot.lane.b32.xlu0 %v2297, 96
      %v2676 = vpop.permute.xlu0 %2675
      %2677 = vrot.lane.b32.xlu0 %v2300, 96
      %v2678 = vpop.permute.xlu0 %2677
      %2679 = vrot.lane.b32.xlu0 %v2305, 96
      %v2680 = vpop.permute.xlu0 %2679
      %2681 = vrot.lane.b32.xlu0 %v2308, 96
      %v2682 = vpop.permute.xlu0 %2681
      %2683 = vrot.lane.b32.xlu0 %v2313, 96
      %v2684 = vpop.permute.xlu0 %2683
      %2685 = vrot.lane.b32.xlu0 %v2316, 96
      %v2686 = vpop.permute.xlu0 %2685
      %2687 = vrot.lane.b32.xlu0 %v2321, 96
      %v2688 = vpop.permute.xlu0 %2687
      %2689 = vrot.lane.b32.xlu0 %v2324, 96
      %v2690 = vpop.permute.xlu0 %2689
      %2691 = vrot.lane.b32.xlu0 %v2329, 96
      %v2692 = vpop.permute.xlu0 %2691
      %2693 = vrot.lane.b32.xlu0 %v2332, 96
      %v2694 = vpop.permute.xlu0 %2693
      %2695 = vrot.lane.b32.xlu0 %v2337, 96
      %v2696 = vpop.permute.xlu0 %2695
      %2697 = vrot.lane.b32.xlu0 %v2340, 96
      %v2698 = vpop.permute.xlu0 %2697
      %2699 = vrot.lane.b32.xlu0 %v2345, 96
      %v2700 = vpop.permute.xlu0 %2699
      %2701 = vrot.lane.b32.xlu0 %v2348, 96
      %v2702 = vpop.permute.xlu0 %2701
      %v2735 = vadd.f32 %v2479, %v2640
      %v2736 = vadd.f32 %v2480, %v2642
      %v2737 = vadd.f32 %v2481, %v2644
      %v2738 = vadd.f32 %v2482, %v2646
      %v2739 = vadd.f32 %v2483, %v2648
      %v2740 = vadd.f32 %v2484, %v2650
      %v2741 = vadd.f32 %v2485, %v2652
      %v2742 = vadd.f32 %v2486, %v2654
      %v2743 = vadd.f32 %v2487, %v2656
      %v2744 = vadd.f32 %v2488, %v2658
      %v2745 = vadd.f32 %v2489, %v2660
      %v2746 = vadd.f32 %v2490, %v2662
      %v2747 = vadd.f32 %v2491, %v2664
      %v2748 = vadd.f32 %v2492, %v2666
      %v2749 = vadd.f32 %v2493, %v2668
      %v2750 = vadd.f32 %v2494, %v2670
      %v2751 = vadd.f32 %v2495, %v2672
      %v2752 = vadd.f32 %v2496, %v2674
      %v2753 = vadd.f32 %v2497, %v2676
      %v2754 = vadd.f32 %v2498, %v2678
      %v2755 = vadd.f32 %v2499, %v2680
      %v2756 = vadd.f32 %v2500, %v2682
      %v2757 = vadd.f32 %v2501, %v2684
      %v2758 = vadd.f32 %v2502, %v2686
      %v2759 = vadd.f32 %v2503, %v2688
      %v2760 = vadd.f32 %v2504, %v2690
      %v2761 = vadd.f32 %v2505, %v2692
      %v2762 = vadd.f32 %v2506, %v2694
      %v2763 = vadd.f32 %v2507, %v2696
      %v2764 = vadd.f32 %v2508, %v2698
      %v2765 = vadd.f32 %v2509, %v2700
      %v2766 = vadd.f32 %v2510, %v2702
      %2799 = vrot.lane.b32.xlu0 %v2607, 64
      %v2800 = vpop.permute.xlu0 %2799
      %2801 = vrot.lane.b32.xlu0 %v2608, 64
      %v2802 = vpop.permute.xlu0 %2801
      %2803 = vrot.lane.b32.xlu0 %v2609, 64
      %v2804 = vpop.permute.xlu0 %2803
      %2805 = vrot.lane.b32.xlu0 %v2610, 64
      %v2806 = vpop.permute.xlu0 %2805
      %2807 = vrot.lane.b32.xlu0 %v2611, 64
      %v2808 = vpop.permute.xlu0 %2807
      %2809 = vrot.lane.b32.xlu0 %v2612, 64
      %v2810 = vpop.permute.xlu0 %2809
      %2811 = vrot.lane.b32.xlu0 %v2613, 64
      %v2812 = vpop.permute.xlu0 %2811
      %2813 = vrot.lane.b32.xlu0 %v2614, 64
      %v2814 = vpop.permute.xlu0 %2813
      %2815 = vrot.lane.b32.xlu0 %v2615, 64
      %v2816 = vpop.permute.xlu0 %2815
      %2817 = vrot.lane.b32.xlu0 %v2616, 64
      %v2818 = vpop.permute.xlu0 %2817
      %2819 = vrot.lane.b32.xlu0 %v2617, 64
      %v2820 = vpop.permute.xlu0 %2819
      %2821 = vrot.lane.b32.xlu0 %v2618, 64
      %v2822 = vpop.permute.xlu0 %2821
      %2823 = vrot.lane.b32.xlu0 %v2619, 64
      %v2824 = vpop.permute.xlu0 %2823
      %2825 = vrot.lane.b32.xlu0 %v2620, 64
      %v2826 = vpop.permute.xlu0 %2825
      %2827 = vrot.lane.b32.xlu0 %v2621, 64
      %v2828 = vpop.permute.xlu0 %2827
      %2829 = vrot.lane.b32.xlu0 %v2622, 64
      %v2830 = vpop.permute.xlu0 %2829
      %2831 = vrot.lane.b32.xlu0 %v2623, 64
      %v2832 = vpop.permute.xlu0 %2831
      %2833 = vrot.lane.b32.xlu0 %v2624, 64
      %v2834 = vpop.permute.xlu0 %2833
      %2835 = vrot.lane.b32.xlu0 %v2625, 64
      %v2836 = vpop.permute.xlu0 %2835
      %2837 = vrot.lane.b32.xlu0 %v2626, 64
      %v2838 = vpop.permute.xlu0 %2837
      %2839 = vrot.lane.b32.xlu0 %v2627, 64
      %v2840 = vpop.permute.xlu0 %2839
      %2841 = vrot.lane.b32.xlu0 %v2628, 64
      %v2842 = vpop.permute.xlu0 %2841
      %2843 = vrot.lane.b32.xlu0 %v2629, 64
      %v2844 = vpop.permute.xlu0 %2843
      %2845 = vrot.lane.b32.xlu0 %v2630, 64
      %v2846 = vpop.permute.xlu0 %2845
      %2847 = vrot.lane.b32.xlu0 %v2631, 64
      %v2848 = vpop.permute.xlu0 %2847
      %2849 = vrot.lane.b32.xlu0 %v2632, 64
      %v2850 = vpop.permute.xlu0 %2849
      %2851 = vrot.lane.b32.xlu0 %v2633, 64
      %v2852 = vpop.permute.xlu0 %2851
      %2853 = vrot.lane.b32.xlu0 %v2634, 64
      %v2854 = vpop.permute.xlu0 %2853
      %2855 = vrot.lane.b32.xlu0 %v2635, 64
      %v2856 = vpop.permute.xlu0 %2855
      %2857 = vrot.lane.b32.xlu0 %v2636, 64
      %v2858 = vpop.permute.xlu0 %2857
      %2859 = vrot.lane.b32.xlu0 %v2637, 64
      %v2860 = vpop.permute.xlu0 %2859
      %2861 = vrot.lane.b32.xlu0 %v2638, 64
      %v2862 = vpop.permute.xlu0 %2861
      %v2895 = vadd.f32 %v2735, %v2800
      %v2896 = vadd.f32 %v2736, %v2802
      %v2897 = vadd.f32 %v2737, %v2804
      %v2898 = vadd.f32 %v2738, %v2806
      %v2899 = vadd.f32 %v2739, %v2808
      %v2900 = vadd.f32 %v2740, %v2810
      %v2901 = vadd.f32 %v2741, %v2812
      %v2902 = vadd.f32 %v2742, %v2814
      %v2903 = vadd.f32 %v2743, %v2816
      %v2904 = vadd.f32 %v2744, %v2818
      %v2905 = vadd.f32 %v2745, %v2820
      %v2906 = vadd.f32 %v2746, %v2822
      %v2907 = vadd.f32 %v2747, %v2824
      %v2908 = vadd.f32 %v2748, %v2826
      %v2909 = vadd.f32 %v2749, %v2828
      %v2910 = vadd.f32 %v2750, %v2830
      %v2911 = vadd.f32 %v2751, %v2832
      %v2912 = vadd.f32 %v2752, %v2834
      %v2913 = vadd.f32 %v2753, %v2836
      %v2914 = vadd.f32 %v2754, %v2838
      %v2915 = vadd.f32 %v2755, %v2840
      %v2916 = vadd.f32 %v2756, %v2842
      %v2917 = vadd.f32 %v2757, %v2844
      %v2918 = vadd.f32 %v2758, %v2846
      %v2919 = vadd.f32 %v2759, %v2848
      %v2920 = vadd.f32 %v2760, %v2850
      %v2921 = vadd.f32 %v2761, %v2852
      %v2922 = vadd.f32 %v2762, %v2854
      %v2923 = vadd.f32 %v2763, %v2856
      %v2924 = vadd.f32 %v2764, %v2858
      %v2925 = vadd.f32 %v2765, %v2860
      %v2926 = vadd.f32 %v2766, %v2862
      %v2928 = vlaneseq
      %v2929 = vshrl.u32 %v2928, 7
      %v2930 = vsub.s32 0, %v2929
      %v2931 = vrot.slane %v756, %v2930
      %v2933 = vadd.f32 %v2895, %v2931
      %v2934 = vadd.f32 %v2896, %v2931
      %v2935 = vadd.f32 %v2897, %v2931
      %v2936 = vadd.f32 %v2898, %v2931
      %v2937 = vadd.f32 %v2899, %v2931
      %v2938 = vadd.f32 %v2900, %v2931
      %v2939 = vadd.f32 %v2901, %v2931
      %v2940 = vadd.f32 %v2902, %v2931
      %v2941 = vadd.f32 %v2903, %v2931
      %v2942 = vadd.f32 %v2904, %v2931
      %v2943 = vadd.f32 %v2905, %v2931
      %v2944 = vadd.f32 %v2906, %v2931
      %v2945 = vadd.f32 %v2907, %v2931
      %v2946 = vadd.f32 %v2908, %v2931
      %v2947 = vadd.f32 %v2909, %v2931
      %v2948 = vadd.f32 %v2910, %v2931
      %v2949 = vadd.f32 %v2911, %v2931
      %v2950 = vadd.f32 %v2912, %v2931
      %v2951 = vadd.f32 %v2913, %v2931
      %v2952 = vadd.f32 %v2914, %v2931
      %v2953 = vadd.f32 %v2915, %v2931
      %v2954 = vadd.f32 %v2916, %v2931
      %v2955 = vadd.f32 %v2917, %v2931
      %v2956 = vadd.f32 %v2918, %v2931
      %v2957 = vadd.f32 %v2919, %v2931
      %v2958 = vadd.f32 %v2920, %v2931
      %v2959 = vadd.f32 %v2921, %v2931
      %v2960 = vadd.f32 %v2922, %v2931
      %v2961 = vadd.f32 %v2923, %v2931
      %v2962 = vadd.f32 %v2924, %v2931
      %v2963 = vadd.f32 %v2925, %v2931
      %v2964 = vadd.f32 %v2926, %v2931
      %v2965 = vadd.f32 %v2933, %v226
      %v2966 = vadd.f32 %v2934, %v227
      %v2967 = vadd.f32 %v2935, %v228
      %v2968 = vadd.f32 %v2936, %v229
      %v2969 = vadd.f32 %v2937, %v230
      %v2970 = vadd.f32 %v2938, %v231
      %v2971 = vadd.f32 %v2939, %v232
      %v2972 = vadd.f32 %v2940, %v233
      %v2973 = vadd.f32 %v2941, %v234
      %v2974 = vadd.f32 %v2942, %v235
      %v2975 = vadd.f32 %v2943, %v236
      %v2976 = vadd.f32 %v2944, %v237
      %v2977 = vadd.f32 %v2945, %v238
      %v2978 = vadd.f32 %v2946, %v239
      %v2979 = vadd.f32 %v2947, %v240
      %v2980 = vadd.f32 %v2948, %v241
      %v2981 = vadd.f32 %v2949, %v242
      %v2982 = vadd.f32 %v2950, %v243
      %v2983 = vadd.f32 %v2951, %v244
      %v2984 = vadd.f32 %v2952, %v245
      %v2985 = vadd.f32 %v2953, %v246
      %v2986 = vadd.f32 %v2954, %v247
      %v2987 = vadd.f32 %v2955, %v248
      %v2988 = vadd.f32 %v2956, %v249
      %v2989 = vadd.f32 %v2957, %v250
      %v2990 = vadd.f32 %v2958, %v251
      %v2991 = vadd.f32 %v2959, %v252
      %v2992 = vadd.f32 %v2960, %v253
      %v2993 = vadd.f32 %v2961, %v254
      %v2994 = vadd.f32 %v2962, %v255
      %v2995 = vadd.f32 %v2963, %v256
      %v2996 = vadd.f32 %v2964, %v257
      %2997 = vst.msk [vmem:[%s224] sm:$0xff] %vm838, %v2965
      %2998 = vst.msk [vmem:[%s224 + $0x8] sm:$0xff] %vm838, %v2966
      %2999 = vst.msk [vmem:[%s224 + $0x10] sm:$0xff] %vm838, %v2967
      %3000 = vst.msk [vmem:[%s224 + $0x18] sm:$0xff] %vm838, %v2968
      %3001 = vst.msk [vmem:[%s224 + $0x20] sm:$0xff] %vm838, %v2969
      %3002 = vst.msk [vmem:[%s224 + $0x28] sm:$0xff] %vm838, %v2970
      %3003 = vst.msk [vmem:[%s224 + $0x30] sm:$0xff] %vm838, %v2971
      %3004 = vst.msk [vmem:[%s224 + $0x38] sm:$0xff] %vm838, %v2972
      %3005 = vst.msk [vmem:[%s224 + $0x40] sm:$0xff] %vm838, %v2973
      %3006 = vst.msk [vmem:[%s224 + $0x48] sm:$0xff] %vm838, %v2974
      %3007 = vst.msk [vmem:[%s224 + $0x50] sm:$0xff] %vm838, %v2975
      %3008 = vst.msk [vmem:[%s224 + $0x58] sm:$0xff] %vm838, %v2976
      %3009 = vst.msk [vmem:[%s224 + $0x60] sm:$0xff] %vm838, %v2977
      %3010 = vst.msk [vmem:[%s224 + $0x68] sm:$0xff] %vm838, %v2978
      %3011 = vst.msk [vmem:[%s224 + $0x70] sm:$0xff] %vm838, %v2979
      %3012 = vst.msk [vmem:[%s224 + $0x78] sm:$0xff] %vm838, %v2980
      %3013 = vst.msk [vmem:[%s224 + $0x80] sm:$0xff] %vm838, %v2981
      %3014 = vst.msk [vmem:[%s224 + $0x88] sm:$0xff] %vm838, %v2982
      %3015 = vst.msk [vmem:[%s224 + $0x90] sm:$0xff] %vm838, %v2983
      %3016 = vst.msk [vmem:[%s224 + $0x98] sm:$0xff] %vm838, %v2984
      %3017 = vst.msk [vmem:[%s224 + $0xa0] sm:$0xff] %vm838, %v2985
      %3018 = vst.msk [vmem:[%s224 + $0xa8] sm:$0xff] %vm838, %v2986
      %3019 = vst.msk [vmem:[%s224 + $0xb0] sm:$0xff] %vm838, %v2987
      %3020 = vst.msk [vmem:[%s224 + $0xb8] sm:$0xff] %vm838, %v2988
      %3021 = vst.msk [vmem:[%s224 + $0xc0] sm:$0xff] %vm838, %v2989
      %3022 = vst.msk [vmem:[%s224 + $0xc8] sm:$0xff] %vm838, %v2990
      %3023 = vst.msk [vmem:[%s224 + $0xd0] sm:$0xff] %vm838, %v2991
      %3024 = vst.msk [vmem:[%s224 + $0xd8] sm:$0xff] %vm838, %v2992
      %3025 = vst.msk [vmem:[%s224 + $0xe0] sm:$0xff] %vm838, %v2993
      %3026 = vst.msk [vmem:[%s224 + $0xe8] sm:$0xff] %vm838, %v2994
      %3027 = vst.msk [vmem:[%s224 + $0xf0] sm:$0xff] %vm838, %v2995
      %3028 = vst.msk [vmem:[%s224 + $0xf8] sm:$0xff] %vm838, %v2996
      %p3029 = scmp.lt.s32.totalorder %s16, 1
      %s3030 = scalar_select %p3029, %s16, 1
      %s3031 = smul.addr %s3030, 32
      %s3032 = smul.addr %s3031, 8
      %s3033 = scalar_lea.vmem %s5, %s3032
      // Predicated region
      $region41: #{tpu_custom_call.1} parent=39 // pred_check
        %p3034 = pneg %p144
      $region42: #{tpu_custom_call.1} parent=39 // pred_check_branch
        %3036 = sbr.rel (%p3034) target = $region44
      $region43: #{tpu_custom_call.1} parent=39 // pred_region
        _
      $region44: #{tpu_custom_call.1} parent=39 // pred_fallthru
        _
    $region40: #{tpu_custom_call.1} parent=5 // pred_fallthru
      _
    %p3037 = scmp.le.s32.totalorder 2, %s11
    // Predicated region
    $region45: #{tpu_custom_call.1} parent=5 // pred_check
      %p3038 = pneg %p3037
    $region46: #{tpu_custom_call.1} parent=5 // pred_check_branch
      %3040 = sbr.rel (%p3038) target = $region48
    $region47: #{tpu_custom_call.1} parent=5 // pred_region
      %s3041 = ssub.s32 %s11, 2
      // Predicated region
      $region49: #{tpu_custom_call.1} parent=47 // pred_check
        %p3042 = pneg %p150
      $region50: #{tpu_custom_call.1} parent=47 // pred_check_branch
        %3044 = sbr.rel (%p3042) target = $region52
      $region51: #{tpu_custom_call.1} parent=47 // pred_region
        %p3045 = scmp.lt.s32.totalorder %s17, 1
        %s3046 = scalar_select %p3045, %s17, 1
        %s3047 = smul.addr %s3046, 32
        %s3048 = smul.addr %s3047, 8
        %s3049 = scalar_lea.vmem %s5, %s3048
      $region52: #{tpu_custom_call.1} parent=47 // pred_fallthru
        _
    $region48: #{tpu_custom_call.1} parent=5 // pred_fallthru
      _
  $region6: #{tpu_custom_call.1} parent=0 // loop_footer
    %s15 = sadd.s32 1, %s11
  $region7: #{tpu_custom_call.1} parent=0 // loop_footer_branch
    %10 = sbr.rel target = $region3
  $region8: #{tpu_custom_call.1} parent=0 // loop_exit
    _

</llo_original>
